<compile_context>
chip_gen: v5e
topology: v5e:2x2
jax: 0.10.0
libtpu: 0.0.40
codegen_flags: <defaults>
</compile_context>

<pallas_src>
import math
import jax
import jax.numpy as jnp
from jax.experimental import pallas as pl
from jax.experimental.pallas import tpu as pltpu  # noqa: F401  (TPU backend)

# ---- model hyper-parameters (small, consistent with the module) ----
VOCAB      = 50
D_MODEL    = 32
N_HEAD     = 4
FFN_HIDDEN = 64
N_LAYERS   = 2
MAX_LEN    = 64
BATCH      = 2
SEQ        = 8
EPS        = 1e-6
NEG_INF    = -1e9
VEC_W      = 128           # lane width of the packed per-layer vector slab

assert 3 * D_MODEL <= VEC_W and FFN_HIDDEN <= VEC_W and D_MODEL % N_HEAD == 0


def _layernorm(x, gamma, beta, eps=EPS):
    # Matches the (non-standard) reference LayerNorm exactly:
    #   mean over last dim, std with unbiased=False,
    #   out = (x - mean) / sqrt(std + eps); out = gamma * out + beta
    mean = jnp.mean(x, axis=-1, keepdims=True)
    var = jnp.mean((x - mean) ** 2, axis=-1, keepdims=True)
    std = jnp.sqrt(var)
    out = (x - mean) * jax.lax.rsqrt(std + eps)
    return gamma * out + beta


def encoder_kernel(ids_ref, emb_ref, pe_ref, mask_ref,
                   wqkv_ref, wo_ref, w1_ref, w2_ref, vec_ref, out_ref):
    BS = ids_ref.shape[0]                 # B * S rows, folded into sublanes
    V, D = emb_ref.shape
    F = w1_ref.shape[-1]
    dk = D // N_HEAD
    scale = 1.0 / math.sqrt(dk)

    # ---- TransformerEmbedding: one-hot token lookup on the MXU + positional add
    ids = ids_ref[...]                                               # (BS, 1) int32
    onehot = (jax.lax.broadcasted_iota(jnp.int32, (BS, V), 1) == ids).astype(jnp.float32)
    x = jnp.dot(onehot, emb_ref[...], preferred_element_type=jnp.float32) + pe_ref[...]
    # TODO(synk): all nn.Dropout layers are identity at inference; not applied.

    # mask -> additive bias, computed once and shared by all heads and all layers
    neg_bias = jnp.where(mask_ref[...] == 0.0, NEG_INF, 0.0)         # (BS, BS)

    for li in range(N_LAYERS):                                       # static layer loop
        wqkv = wqkv_ref[li]                                          # (D, 3D)
        wo = wo_ref[li]                                              # (D, D)
        w1 = w1_ref[li]                                              # (D, F)
        w2 = w2_ref[li]                                              # (F, D)
        vec = vec_ref[li]                                            # (8, VEC_W) packed
        bqkv = vec[0:1, 0:3 * D]
        b1   = vec[1:2, 0:F]
        bo, g1, be1 = vec[2:3, 0:D], vec[3:4, 0:D], vec[4:5, 0:D]
        b2, g2, be2 = vec[5:6, 0:D], vec[6:7, 0:D], vec[7:8, 0:D]

        # ---- multi-head self attention (fused QKV projection) ----
        qkv = jnp.dot(x, wqkv, preferred_element_type=jnp.float32) + bqkv   # (BS, 3D)

        ctx_heads = []
        for h in range(N_HEAD):                                      # static head loop
            qh = qkv[:, h * dk:(h + 1) * dk]                         # (BS, dk)
            kh = qkv[:, D + h * dk:D + (h + 1) * dk]
            vh = qkv[:, 2 * D + h * dk:2 * D + (h + 1) * dk]
            # q @ k^T without an explicit transpose (contract last dims of both)
            s = jax.lax.dot_general(qh, kh, (((1,), (1,)), ((), ())),
                                    preferred_element_type=jnp.float32)     # (BS, BS)
            s = s * scale + neg_bias
            m = jnp.max(s, axis=-1, keepdims=True)
            p = jnp.exp(s - m)
            denom = jnp.sum(p, axis=-1, keepdims=True)
            p = p * pl.reciprocal(denom, approx=True)                # EUP reciprocal
            ctx_heads.append(jnp.dot(p, vh, preferred_element_type=jnp.float32))
        ctx = jnp.concatenate(ctx_heads, axis=-1)                    # (BS, D)

        attn = jnp.dot(ctx, wo, preferred_element_type=jnp.float32) + bo
        y = _layernorm(attn + x, g1, be1)

        # ---- position-wise feed-forward ----
        hidden = jnp.maximum(
            jnp.dot(y, w1, preferred_element_type=jnp.float32) + b1, 0.0)
        f = jnp.dot(hidden, w2, preferred_element_type=jnp.float32) + b2
        x = _layernorm(f + y, g2, be2)

    out_ref[...] = x.astype(out_ref.dtype)


# ----------------- parameter / embedding setup (plain JAX glue) -----------------
def make_positional_encoding(max_len, d_model):
    pos = jnp.arange(max_len, dtype=jnp.float32)[:, None]
    _2i = jnp.arange(0, d_model, 2, dtype=jnp.float32)
    angle = pos / jnp.power(10000.0, _2i / d_model)
    pe = jnp.zeros((max_len, d_model), jnp.float32)
    pe = pe.at[:, 0::2].set(jnp.sin(angle))
    pe = pe.at[:, 1::2].set(jnp.cos(angle))
    return pe


def _row(v, width=VEC_W):
    v = v.reshape(1, -1).astype(jnp.float32)
    return jnp.pad(v, ((0, 0), (0, width - v.shape[1])))


def init_params(key):
    keys = jax.random.split(key, 1 + N_LAYERS)
    # token embedding table; padding_idx=1 row is zero
    emb = jax.random.normal(keys[0], (VOCAB, D_MODEL), jnp.float32) * 0.02
    emb = emb.at[1, :].set(0.0)

    def rnd(k, shape, s=0.02):
        return jax.random.normal(k, shape, jnp.float32) * s

    wqkv_l, wo_l, w1_l, w2_l, vec_l = [], [], [], [], []
    for li in range(N_LAYERS):
        lk = jax.random.split(keys[1 + li], 10)
        wq = rnd(lk[0], (D_MODEL, D_MODEL))
        wk = rnd(lk[1], (D_MODEL, D_MODEL))
        wv = rnd(lk[2], (D_MODEL, D_MODEL))
        wo = rnd(lk[3], (D_MODEL, D_MODEL))
        w1 = rnd(lk[4], (D_MODEL, FFN_HIDDEN))
        w2 = rnd(lk[5], (FFN_HIDDEN, D_MODEL))
        bqkv = rnd(lk[6], (3 * D_MODEL,), 0.01)                      # bq|bk|bv
        bo = rnd(lk[7], (D_MODEL,), 0.01)
        b1 = rnd(lk[8], (FFN_HIDDEN,), 0.01)
        b2 = rnd(lk[9], (D_MODEL,), 0.01)
        ones_d = jnp.ones((D_MODEL,), jnp.float32)
        zeros_d = jnp.zeros((D_MODEL,), jnp.float32)

        wqkv_l.append(jnp.concatenate([wq, wk, wv], axis=1))         # (D, 3D)
        wo_l.append(wo)
        w1_l.append(w1)
        w2_l.append(w2)
        # packed (8, 128) slab: bqkv | b1 | bo | gamma1 | beta1 | b2 | gamma2 | beta2
        vec_l.append(jnp.concatenate(
            [_row(bqkv), _row(b1), _row(bo), _row(ones_d), _row(zeros_d),
             _row(b2), _row(ones_d), _row(zeros_d)], axis=0))

    return {"emb": emb,
            "pe": make_positional_encoding(MAX_LEN, D_MODEL),
            "wqkv": jnp.stack(wqkv_l),          # (L, D, 3D)
            "wo": jnp.stack(wo_l),              # (L, D, D)
            "w1": jnp.stack(w1_l),              # (L, D, F)
            "w2": jnp.stack(w2_l),              # (L, F, D)
            "vecs": jnp.stack(vec_l)}           # (L, 8, 128)


def _expand_mask(mask):
    """(B, S, S) attention mask -> (B*S, B*S) block-diagonal mask (0 = masked).

    Cross-batch positions are 0 (masked) so folding the batch into the sublane
    axis never mixes batches inside the kernel's single softmax."""
    B, S, _ = mask.shape
    big = jnp.zeros((B, S, B, S), jnp.float32)
    idx = jnp.arange(B)
    big = big.at[idx, :, idx, :].set(mask.astype(jnp.float32))
    return big.reshape(B * S, B * S)


def encoder_forward(token_ids, mask, params):
    """token_ids: (B, S) int32, mask: (B, S, S) float, params: dict from init_params."""
    B, S = token_ids.shape
    ids_col = token_ids.reshape(B * S, 1).astype(jnp.int32)
    pe_rows = jnp.tile(params["pe"][:S, :], (B, 1))                  # (B*S, D)
    mask_big = _expand_mask(mask)                                    # (B*S, B*S)

    out2d = pl.pallas_call(
        encoder_kernel,
        out_shape=jax.ShapeDtypeStruct((B * S, D_MODEL), jnp.float32),
    )(ids_col, params["emb"], pe_rows, mask_big,
      params["wqkv"], params["wo"], params["w1"], params["w2"], params["vecs"])
    return out2d.reshape(B, S, D_MODEL)


if __name__ == "__main__":
    key = jax.random.PRNGKey(0)
    k_ids, k_params = jax.random.split(key)

    token_ids = jax.random.randint(k_ids, (BATCH, SEQ), 0, VOCAB, dtype=jnp.int32)
    mask = jnp.ones((BATCH, SEQ, SEQ), jnp.float32)   # all-ones mask (no masking)

    params = init_params(k_params)

    fwd = jax.jit(encoder_forward)
    out = fwd(token_ids, mask, params)
    jax.block_until_ready(out)
    assert out.shape == (BATCH, SEQ, D_MODEL)
    assert bool(jnp.all(jnp.isfinite(out)))
    print("KERNEL_OK")
</pallas_src>

<mosaic_0001>
module attributes {stable_mosaic.version = 11 : i64} {
  func.func @encoder_kernel(%arg0: memref<16x1xi32, #tpu.memory_space<vmem>>, %arg1: memref<50x32xf32, #tpu.memory_space<vmem>>, %arg2: memref<16x32xf32, #tpu.memory_space<vmem>>, %arg3: memref<16x16xf32, #tpu.memory_space<vmem>>, %arg4: memref<2x32x96xf32, #tpu.memory_space<vmem>>, %arg5: memref<2x32x32xf32, #tpu.memory_space<vmem>>, %arg6: memref<2x32x64xf32, #tpu.memory_space<vmem>>, %arg7: memref<2x64x32xf32, #tpu.memory_space<vmem>>, %arg8: memref<2x8x128xf32, #tpu.memory_space<vmem>>, %arg9: memref<16x32xf32, #tpu.memory_space<vmem>>) attributes {dimension_semantics = [], scalar_prefetch = 0 : i64, scratch_operands = 0 : i64, tpu.core_type = #tpu.core_type<tc>} {
    %c0 = arith.constant 0 : index
    %c0_0 = arith.constant 0 : index
    %0 = vector.load %arg0[%c0, %c0_0] : memref<16x1xi32, #tpu.memory_space<vmem>>, vector<16x1xi32>
    %1 = tpu.iota {dimensions = array<i32: 1>} : vector<16x50xi32>
    %2 = vector.broadcast %0 : vector<16x1xi32> to vector<16x50xi32>
    %3 = arith.cmpi eq, %1, %2 : vector<16x50xi32>
    %4 = arith.extui %3 : vector<16x50xi1> to vector<16x50xi32>
    %5 = arith.sitofp %4 : vector<16x50xi32> to vector<16x50xf32>
    %c0_1 = arith.constant 0 : index
    %c0_2 = arith.constant 0 : index
    %6 = vector.load %arg1[%c0_1, %c0_2] : memref<50x32xf32, #tpu.memory_space<vmem>>, vector<50x32xf32>
    %cst = arith.constant dense<0.000000e+00> : vector<16x32xf32>
    %7 = tpu.matmul %5, %6, %cst {dimension_numbers = #tpu.dot_dimension_numbers<[1], [0], [0], [1], [0, 0, 1, 1], [], []>} : vector<16x50xf32>, vector<50x32xf32>, vector<16x32xf32> -> vector<16x32xf32>
    %c0_3 = arith.constant 0 : index
    %c0_4 = arith.constant 0 : index
    %8 = vector.load %arg2[%c0_3, %c0_4] : memref<16x32xf32, #tpu.memory_space<vmem>>, vector<16x32xf32>
    %9 = arith.addf %7, %8 : vector<16x32xf32>
    %c0_5 = arith.constant 0 : index
    %c0_6 = arith.constant 0 : index
    %10 = vector.load %arg3[%c0_5, %c0_6] : memref<16x16xf32, #tpu.memory_space<vmem>>, vector<16x16xf32>
    %cst_7 = arith.constant 0.000000e+00 : f32
    %11 = vector.broadcast %cst_7 : f32 to vector<16x16xf32>
    %12 = arith.cmpf oeq, %10, %11 : vector<16x16xf32>
    %cst_8 = arith.constant -1.000000e+09 : f32
    %cst_9 = arith.constant 0.000000e+00 : f32
    %13 = vector.broadcast %cst_8 : f32 to vector<16x16xf32>
    %14 = vector.broadcast %cst_9 : f32 to vector<16x16xf32>
    %15 = arith.select %12, %13, %14 : vector<16x16xi1>, vector<16x16xf32>
    %c0_10 = arith.constant 0 : index
    %c0_11 = arith.constant 0 : index
    %c0_12 = arith.constant 0 : index
    %16 = vector.load %arg4[%c0_10, %c0_11, %c0_12] : memref<2x32x96xf32, #tpu.memory_space<vmem>>, vector<1x32x96xf32>
    %17 = vector.shape_cast %16 : vector<1x32x96xf32> to vector<32x96xf32>
    %c0_13 = arith.constant 0 : index
    %c0_14 = arith.constant 0 : index
    %c0_15 = arith.constant 0 : index
    %18 = vector.load %arg5[%c0_13, %c0_14, %c0_15] : memref<2x32x32xf32, #tpu.memory_space<vmem>>, vector<1x32x32xf32>
    %19 = vector.shape_cast %18 : vector<1x32x32xf32> to vector<32x32xf32>
    %c0_16 = arith.constant 0 : index
    %c0_17 = arith.constant 0 : index
    %c0_18 = arith.constant 0 : index
    %20 = vector.load %arg6[%c0_16, %c0_17, %c0_18] : memref<2x32x64xf32, #tpu.memory_space<vmem>>, vector<1x32x64xf32>
    %21 = vector.shape_cast %20 : vector<1x32x64xf32> to vector<32x64xf32>
    %c0_19 = arith.constant 0 : index
    %c0_20 = arith.constant 0 : index
    %c0_21 = arith.constant 0 : index
    %22 = vector.load %arg7[%c0_19, %c0_20, %c0_21] : memref<2x64x32xf32, #tpu.memory_space<vmem>>, vector<1x64x32xf32>
    %23 = vector.shape_cast %22 : vector<1x64x32xf32> to vector<64x32xf32>
    %c0_22 = arith.constant 0 : index
    %c0_23 = arith.constant 0 : index
    %c0_24 = arith.constant 0 : index
    %24 = vector.load %arg8[%c0_22, %c0_23, %c0_24] : memref<2x8x128xf32, #tpu.memory_space<vmem>>, vector<1x8x128xf32>
    %25 = vector.shape_cast %24 : vector<1x8x128xf32> to vector<8x128xf32>
    %26 = vector.extract_strided_slice %25 {offsets = [0, 0], sizes = [1, 96], strides = [1, 1]} : vector<8x128xf32> to vector<1x96xf32>
    %27 = vector.extract_strided_slice %25 {offsets = [1, 0], sizes = [1, 64], strides = [1, 1]} : vector<8x128xf32> to vector<1x64xf32>
    %28 = vector.extract_strided_slice %25 {offsets = [2, 0], sizes = [1, 32], strides = [1, 1]} : vector<8x128xf32> to vector<1x32xf32>
    %29 = vector.extract_strided_slice %25 {offsets = [3, 0], sizes = [1, 32], strides = [1, 1]} : vector<8x128xf32> to vector<1x32xf32>
    %30 = vector.extract_strided_slice %25 {offsets = [4, 0], sizes = [1, 32], strides = [1, 1]} : vector<8x128xf32> to vector<1x32xf32>
    %31 = vector.extract_strided_slice %25 {offsets = [5, 0], sizes = [1, 32], strides = [1, 1]} : vector<8x128xf32> to vector<1x32xf32>
    %32 = vector.extract_strided_slice %25 {offsets = [6, 0], sizes = [1, 32], strides = [1, 1]} : vector<8x128xf32> to vector<1x32xf32>
    %33 = vector.extract_strided_slice %25 {offsets = [7, 0], sizes = [1, 32], strides = [1, 1]} : vector<8x128xf32> to vector<1x32xf32>
    %cst_25 = arith.constant dense<0.000000e+00> : vector<16x96xf32>
    %34 = tpu.matmul %9, %17, %cst_25 {dimension_numbers = #tpu.dot_dimension_numbers<[1], [0], [0], [1], [0, 0, 1, 1], [], []>} : vector<16x32xf32>, vector<32x96xf32>, vector<16x96xf32> -> vector<16x96xf32>
    %35 = vector.broadcast %26 : vector<1x96xf32> to vector<16x96xf32>
    %36 = arith.addf %34, %35 : vector<16x96xf32>
    %37 = vector.extract_strided_slice %36 {offsets = [0, 0], sizes = [16, 8], strides = [1, 1]} : vector<16x96xf32> to vector<16x8xf32>
    %38 = vector.extract_strided_slice %36 {offsets = [0, 32], sizes = [16, 8], strides = [1, 1]} : vector<16x96xf32> to vector<16x8xf32>
    %39 = vector.extract_strided_slice %36 {offsets = [0, 64], sizes = [16, 8], strides = [1, 1]} : vector<16x96xf32> to vector<16x8xf32>
    %cst_26 = arith.constant dense<0.000000e+00> : vector<16x16xf32>
    %40 = tpu.matmul %37, %38, %cst_26 {dimension_numbers = #tpu.dot_dimension_numbers<[1], [1], [0], [0], [0, 0, 1, 0], [], []>} : vector<16x8xf32>, vector<16x8xf32>, vector<16x16xf32> -> vector<16x16xf32>
    %cst_27 = arith.constant 0.353553385 : f32
    %41 = vector.broadcast %cst_27 : f32 to vector<16x16xf32>
    %42 = arith.mulf %40, %41 : vector<16x16xf32>
    %43 = arith.addf %42, %15 : vector<16x16xf32>
    %cst_28 = arith.constant dense<0xFF800000> : vector<16xf32>
    %44 = vector.multi_reduction <maximumf>, %43, %cst_28 [1] : vector<16x16xf32> to vector<16xf32>
    %45 = vector.shape_cast %44 : vector<16xf32> to vector<16x1xf32>
    %46 = vector.broadcast %45 : vector<16x1xf32> to vector<16x16xf32>
    %47 = arith.subf %43, %46 : vector<16x16xf32>
    %48 = math.exp %47 : vector<16x16xf32>
    %cst_29 = arith.constant dense<0.000000e+00> : vector<16xf32>
    %49 = vector.multi_reduction <add>, %48, %cst_29 [1] : vector<16x16xf32> to vector<16xf32>
    %50 = vector.shape_cast %49 : vector<16xf32> to vector<16x1xf32>
    %51 = tpu.reciprocal %50 {approx = true} : vector<16x1xf32> -> vector<16x1xf32>
    %52 = vector.broadcast %51 : vector<16x1xf32> to vector<16x16xf32>
    %53 = arith.mulf %48, %52 : vector<16x16xf32>
    %cst_30 = arith.constant dense<0.000000e+00> : vector<16x8xf32>
    %54 = tpu.matmul %53, %39, %cst_30 {dimension_numbers = #tpu.dot_dimension_numbers<[1], [0], [0], [1], [0, 0, 1, 1], [], []>} : vector<16x16xf32>, vector<16x8xf32>, vector<16x8xf32> -> vector<16x8xf32>
    %55 = vector.extract_strided_slice %36 {offsets = [0, 8], sizes = [16, 8], strides = [1, 1]} : vector<16x96xf32> to vector<16x8xf32>
    %56 = vector.extract_strided_slice %36 {offsets = [0, 40], sizes = [16, 8], strides = [1, 1]} : vector<16x96xf32> to vector<16x8xf32>
    %57 = vector.extract_strided_slice %36 {offsets = [0, 72], sizes = [16, 8], strides = [1, 1]} : vector<16x96xf32> to vector<16x8xf32>
    %cst_31 = arith.constant dense<0.000000e+00> : vector<16x16xf32>
    %58 = tpu.matmul %55, %56, %cst_31 {dimension_numbers = #tpu.dot_dimension_numbers<[1], [1], [0], [0], [0, 0, 1, 0], [], []>} : vector<16x8xf32>, vector<16x8xf32>, vector<16x16xf32> -> vector<16x16xf32>
    %cst_32 = arith.constant 0.353553385 : f32
    %59 = vector.broadcast %cst_32 : f32 to vector<16x16xf32>
    %60 = arith.mulf %58, %59 : vector<16x16xf32>
    %61 = arith.addf %60, %15 : vector<16x16xf32>
    %cst_33 = arith.constant dense<0xFF800000> : vector<16xf32>
    %62 = vector.multi_reduction <maximumf>, %61, %cst_33 [1] : vector<16x16xf32> to vector<16xf32>
    %63 = vector.shape_cast %62 : vector<16xf32> to vector<16x1xf32>
    %64 = vector.broadcast %63 : vector<16x1xf32> to vector<16x16xf32>
    %65 = arith.subf %61, %64 : vector<16x16xf32>
    %66 = math.exp %65 : vector<16x16xf32>
    %cst_34 = arith.constant dense<0.000000e+00> : vector<16xf32>
    %67 = vector.multi_reduction <add>, %66, %cst_34 [1] : vector<16x16xf32> to vector<16xf32>
    %68 = vector.shape_cast %67 : vector<16xf32> to vector<16x1xf32>
    %69 = tpu.reciprocal %68 {approx = true} : vector<16x1xf32> -> vector<16x1xf32>
    %70 = vector.broadcast %69 : vector<16x1xf32> to vector<16x16xf32>
    %71 = arith.mulf %66, %70 : vector<16x16xf32>
    %cst_35 = arith.constant dense<0.000000e+00> : vector<16x8xf32>
    %72 = tpu.matmul %71, %57, %cst_35 {dimension_numbers = #tpu.dot_dimension_numbers<[1], [0], [0], [1], [0, 0, 1, 1], [], []>} : vector<16x16xf32>, vector<16x8xf32>, vector<16x8xf32> -> vector<16x8xf32>
    %73 = vector.extract_strided_slice %36 {offsets = [0, 16], sizes = [16, 8], strides = [1, 1]} : vector<16x96xf32> to vector<16x8xf32>
    %74 = vector.extract_strided_slice %36 {offsets = [0, 48], sizes = [16, 8], strides = [1, 1]} : vector<16x96xf32> to vector<16x8xf32>
    %75 = vector.extract_strided_slice %36 {offsets = [0, 80], sizes = [16, 8], strides = [1, 1]} : vector<16x96xf32> to vector<16x8xf32>
    %cst_36 = arith.constant dense<0.000000e+00> : vector<16x16xf32>
    %76 = tpu.matmul %73, %74, %cst_36 {dimension_numbers = #tpu.dot_dimension_numbers<[1], [1], [0], [0], [0, 0, 1, 0], [], []>} : vector<16x8xf32>, vector<16x8xf32>, vector<16x16xf32> -> vector<16x16xf32>
    %cst_37 = arith.constant 0.353553385 : f32
    %77 = vector.broadcast %cst_37 : f32 to vector<16x16xf32>
    %78 = arith.mulf %76, %77 : vector<16x16xf32>
    %79 = arith.addf %78, %15 : vector<16x16xf32>
    %cst_38 = arith.constant dense<0xFF800000> : vector<16xf32>
    %80 = vector.multi_reduction <maximumf>, %79, %cst_38 [1] : vector<16x16xf32> to vector<16xf32>
    %81 = vector.shape_cast %80 : vector<16xf32> to vector<16x1xf32>
    %82 = vector.broadcast %81 : vector<16x1xf32> to vector<16x16xf32>
    %83 = arith.subf %79, %82 : vector<16x16xf32>
    %84 = math.exp %83 : vector<16x16xf32>
    %cst_39 = arith.constant dense<0.000000e+00> : vector<16xf32>
    %85 = vector.multi_reduction <add>, %84, %cst_39 [1] : vector<16x16xf32> to vector<16xf32>
    %86 = vector.shape_cast %85 : vector<16xf32> to vector<16x1xf32>
    %87 = tpu.reciprocal %86 {approx = true} : vector<16x1xf32> -> vector<16x1xf32>
    %88 = vector.broadcast %87 : vector<16x1xf32> to vector<16x16xf32>
    %89 = arith.mulf %84, %88 : vector<16x16xf32>
    %cst_40 = arith.constant dense<0.000000e+00> : vector<16x8xf32>
    %90 = tpu.matmul %89, %75, %cst_40 {dimension_numbers = #tpu.dot_dimension_numbers<[1], [0], [0], [1], [0, 0, 1, 1], [], []>} : vector<16x16xf32>, vector<16x8xf32>, vector<16x8xf32> -> vector<16x8xf32>
    %91 = vector.extract_strided_slice %36 {offsets = [0, 24], sizes = [16, 8], strides = [1, 1]} : vector<16x96xf32> to vector<16x8xf32>
    %92 = vector.extract_strided_slice %36 {offsets = [0, 56], sizes = [16, 8], strides = [1, 1]} : vector<16x96xf32> to vector<16x8xf32>
    %93 = vector.extract_strided_slice %36 {offsets = [0, 88], sizes = [16, 8], strides = [1, 1]} : vector<16x96xf32> to vector<16x8xf32>
    %cst_41 = arith.constant dense<0.000000e+00> : vector<16x16xf32>
    %94 = tpu.matmul %91, %92, %cst_41 {dimension_numbers = #tpu.dot_dimension_numbers<[1], [1], [0], [0], [0, 0, 1, 0], [], []>} : vector<16x8xf32>, vector<16x8xf32>, vector<16x16xf32> -> vector<16x16xf32>
    %cst_42 = arith.constant 0.353553385 : f32
    %95 = vector.broadcast %cst_42 : f32 to vector<16x16xf32>
    %96 = arith.mulf %94, %95 : vector<16x16xf32>
    %97 = arith.addf %96, %15 : vector<16x16xf32>
    %cst_43 = arith.constant dense<0xFF800000> : vector<16xf32>
    %98 = vector.multi_reduction <maximumf>, %97, %cst_43 [1] : vector<16x16xf32> to vector<16xf32>
    %99 = vector.shape_cast %98 : vector<16xf32> to vector<16x1xf32>
    %100 = vector.broadcast %99 : vector<16x1xf32> to vector<16x16xf32>
    %101 = arith.subf %97, %100 : vector<16x16xf32>
    %102 = math.exp %101 : vector<16x16xf32>
    %cst_44 = arith.constant dense<0.000000e+00> : vector<16xf32>
    %103 = vector.multi_reduction <add>, %102, %cst_44 [1] : vector<16x16xf32> to vector<16xf32>
    %104 = vector.shape_cast %103 : vector<16xf32> to vector<16x1xf32>
    %105 = tpu.reciprocal %104 {approx = true} : vector<16x1xf32> -> vector<16x1xf32>
    %106 = vector.broadcast %105 : vector<16x1xf32> to vector<16x16xf32>
    %107 = arith.mulf %102, %106 : vector<16x16xf32>
    %cst_45 = arith.constant dense<0.000000e+00> : vector<16x8xf32>
    %108 = tpu.matmul %107, %93, %cst_45 {dimension_numbers = #tpu.dot_dimension_numbers<[1], [0], [0], [1], [0, 0, 1, 1], [], []>} : vector<16x16xf32>, vector<16x8xf32>, vector<16x8xf32> -> vector<16x8xf32>
    %109 = tpu.concatenate %54, %72, %90, %108 in 1 : vector<16x8xf32>, vector<16x8xf32>, vector<16x8xf32>, vector<16x8xf32> -> vector<16x32xf32>
    %cst_46 = arith.constant dense<0.000000e+00> : vector<16x32xf32>
    %110 = tpu.matmul %109, %19, %cst_46 {dimension_numbers = #tpu.dot_dimension_numbers<[1], [0], [0], [1], [0, 0, 1, 1], [], []>} : vector<16x32xf32>, vector<32x32xf32>, vector<16x32xf32> -> vector<16x32xf32>
    %111 = vector.broadcast %28 : vector<1x32xf32> to vector<16x32xf32>
    %112 = arith.addf %110, %111 : vector<16x32xf32>
    %113 = arith.addf %112, %9 : vector<16x32xf32>
    %cst_47 = arith.constant dense<0.000000e+00> : vector<16xf32>
    %114 = vector.multi_reduction <add>, %113, %cst_47 [1] : vector<16x32xf32> to vector<16xf32>
    %115 = vector.shape_cast %114 : vector<16xf32> to vector<16x1xf32>
    %cst_48 = arith.constant 3.200000e+01 : f32
    %116 = vector.broadcast %cst_48 : f32 to vector<16x1xf32>
    %117 = arith.divf %115, %116 : vector<16x1xf32>
    %118 = vector.broadcast %117 : vector<16x1xf32> to vector<16x32xf32>
    %119 = arith.subf %113, %118 : vector<16x32xf32>
    %120 = arith.mulf %119, %119 : vector<16x32xf32>
    %cst_49 = arith.constant dense<0.000000e+00> : vector<16xf32>
    %121 = vector.multi_reduction <add>, %120, %cst_49 [1] : vector<16x32xf32> to vector<16xf32>
    %122 = vector.shape_cast %121 : vector<16xf32> to vector<16x1xf32>
    %cst_50 = arith.constant 3.200000e+01 : f32
    %123 = vector.broadcast %cst_50 : f32 to vector<16x1xf32>
    %124 = arith.divf %122, %123 : vector<16x1xf32>
    %125 = math.sqrt %124 : vector<16x1xf32>
    %126 = vector.broadcast %117 : vector<16x1xf32> to vector<16x32xf32>
    %127 = arith.subf %113, %126 : vector<16x32xf32>
    %cst_51 = arith.constant 9.99999997E-7 : f32
    %128 = vector.broadcast %cst_51 : f32 to vector<16x1xf32>
    %129 = arith.addf %125, %128 : vector<16x1xf32>
    %130 = math.rsqrt %129 : vector<16x1xf32>
    %131 = vector.broadcast %130 : vector<16x1xf32> to vector<16x32xf32>
    %132 = arith.mulf %127, %131 : vector<16x32xf32>
    %133 = vector.broadcast %29 : vector<1x32xf32> to vector<16x32xf32>
    %134 = arith.mulf %133, %132 : vector<16x32xf32>
    %135 = vector.broadcast %30 : vector<1x32xf32> to vector<16x32xf32>
    %136 = arith.addf %134, %135 : vector<16x32xf32>
    %cst_52 = arith.constant dense<0.000000e+00> : vector<16x64xf32>
    %137 = tpu.matmul %136, %21, %cst_52 {dimension_numbers = #tpu.dot_dimension_numbers<[1], [0], [0], [1], [0, 0, 1, 1], [], []>} : vector<16x32xf32>, vector<32x64xf32>, vector<16x64xf32> -> vector<16x64xf32>
    %138 = vector.broadcast %27 : vector<1x64xf32> to vector<16x64xf32>
    %139 = arith.addf %137, %138 : vector<16x64xf32>
    %cst_53 = arith.constant 0.000000e+00 : f32
    %140 = vector.broadcast %cst_53 : f32 to vector<16x64xf32>
    %141 = arith.maximumf %139, %140 : vector<16x64xf32>
    %cst_54 = arith.constant dense<0.000000e+00> : vector<16x32xf32>
    %142 = tpu.matmul %141, %23, %cst_54 {dimension_numbers = #tpu.dot_dimension_numbers<[1], [0], [0], [1], [0, 0, 1, 1], [], []>} : vector<16x64xf32>, vector<64x32xf32>, vector<16x32xf32> -> vector<16x32xf32>
    %143 = vector.broadcast %31 : vector<1x32xf32> to vector<16x32xf32>
    %144 = arith.addf %142, %143 : vector<16x32xf32>
    %145 = arith.addf %144, %136 : vector<16x32xf32>
    %cst_55 = arith.constant dense<0.000000e+00> : vector<16xf32>
    %146 = vector.multi_reduction <add>, %145, %cst_55 [1] : vector<16x32xf32> to vector<16xf32>
    %147 = vector.shape_cast %146 : vector<16xf32> to vector<16x1xf32>
    %cst_56 = arith.constant 3.200000e+01 : f32
    %148 = vector.broadcast %cst_56 : f32 to vector<16x1xf32>
    %149 = arith.divf %147, %148 : vector<16x1xf32>
    %150 = vector.broadcast %149 : vector<16x1xf32> to vector<16x32xf32>
    %151 = arith.subf %145, %150 : vector<16x32xf32>
    %152 = arith.mulf %151, %151 : vector<16x32xf32>
    %cst_57 = arith.constant dense<0.000000e+00> : vector<16xf32>
    %153 = vector.multi_reduction <add>, %152, %cst_57 [1] : vector<16x32xf32> to vector<16xf32>
    %154 = vector.shape_cast %153 : vector<16xf32> to vector<16x1xf32>
    %cst_58 = arith.constant 3.200000e+01 : f32
    %155 = vector.broadcast %cst_58 : f32 to vector<16x1xf32>
    %156 = arith.divf %154, %155 : vector<16x1xf32>
    %157 = math.sqrt %156 : vector<16x1xf32>
    %158 = vector.broadcast %149 : vector<16x1xf32> to vector<16x32xf32>
    %159 = arith.subf %145, %158 : vector<16x32xf32>
    %cst_59 = arith.constant 9.99999997E-7 : f32
    %160 = vector.broadcast %cst_59 : f32 to vector<16x1xf32>
    %161 = arith.addf %157, %160 : vector<16x1xf32>
    %162 = math.rsqrt %161 : vector<16x1xf32>
    %163 = vector.broadcast %162 : vector<16x1xf32> to vector<16x32xf32>
    %164 = arith.mulf %159, %163 : vector<16x32xf32>
    %165 = vector.broadcast %32 : vector<1x32xf32> to vector<16x32xf32>
    %166 = arith.mulf %165, %164 : vector<16x32xf32>
    %167 = vector.broadcast %33 : vector<1x32xf32> to vector<16x32xf32>
    %168 = arith.addf %166, %167 : vector<16x32xf32>
    %c1 = arith.constant 1 : index
    %c0_60 = arith.constant 0 : index
    %c0_61 = arith.constant 0 : index
    %169 = vector.load %arg4[%c1, %c0_60, %c0_61] : memref<2x32x96xf32, #tpu.memory_space<vmem>>, vector<1x32x96xf32>
    %170 = vector.shape_cast %169 : vector<1x32x96xf32> to vector<32x96xf32>
    %c1_62 = arith.constant 1 : index
    %c0_63 = arith.constant 0 : index
    %c0_64 = arith.constant 0 : index
    %171 = vector.load %arg5[%c1_62, %c0_63, %c0_64] : memref<2x32x32xf32, #tpu.memory_space<vmem>>, vector<1x32x32xf32>
    %172 = vector.shape_cast %171 : vector<1x32x32xf32> to vector<32x32xf32>
    %c1_65 = arith.constant 1 : index
    %c0_66 = arith.constant 0 : index
    %c0_67 = arith.constant 0 : index
    %173 = vector.load %arg6[%c1_65, %c0_66, %c0_67] : memref<2x32x64xf32, #tpu.memory_space<vmem>>, vector<1x32x64xf32>
    %174 = vector.shape_cast %173 : vector<1x32x64xf32> to vector<32x64xf32>
    %c1_68 = arith.constant 1 : index
    %c0_69 = arith.constant 0 : index
    %c0_70 = arith.constant 0 : index
    %175 = vector.load %arg7[%c1_68, %c0_69, %c0_70] : memref<2x64x32xf32, #tpu.memory_space<vmem>>, vector<1x64x32xf32>
    %176 = vector.shape_cast %175 : vector<1x64x32xf32> to vector<64x32xf32>
    %c1_71 = arith.constant 1 : index
    %c0_72 = arith.constant 0 : index
    %c0_73 = arith.constant 0 : index
    %177 = vector.load %arg8[%c1_71, %c0_72, %c0_73] : memref<2x8x128xf32, #tpu.memory_space<vmem>>, vector<1x8x128xf32>
    %178 = vector.shape_cast %177 : vector<1x8x128xf32> to vector<8x128xf32>
    %179 = vector.extract_strided_slice %178 {offsets = [0, 0], sizes = [1, 96], strides = [1, 1]} : vector<8x128xf32> to vector<1x96xf32>
    %180 = vector.extract_strided_slice %178 {offsets = [1, 0], sizes = [1, 64], strides = [1, 1]} : vector<8x128xf32> to vector<1x64xf32>
    %181 = vector.extract_strided_slice %178 {offsets = [2, 0], sizes = [1, 32], strides = [1, 1]} : vector<8x128xf32> to vector<1x32xf32>
    %182 = vector.extract_strided_slice %178 {offsets = [3, 0], sizes = [1, 32], strides = [1, 1]} : vector<8x128xf32> to vector<1x32xf32>
    %183 = vector.extract_strided_slice %178 {offsets = [4, 0], sizes = [1, 32], strides = [1, 1]} : vector<8x128xf32> to vector<1x32xf32>
    %184 = vector.extract_strided_slice %178 {offsets = [5, 0], sizes = [1, 32], strides = [1, 1]} : vector<8x128xf32> to vector<1x32xf32>
    %185 = vector.extract_strided_slice %178 {offsets = [6, 0], sizes = [1, 32], strides = [1, 1]} : vector<8x128xf32> to vector<1x32xf32>
    %186 = vector.extract_strided_slice %178 {offsets = [7, 0], sizes = [1, 32], strides = [1, 1]} : vector<8x128xf32> to vector<1x32xf32>
    %cst_74 = arith.constant dense<0.000000e+00> : vector<16x96xf32>
    %187 = tpu.matmul %168, %170, %cst_74 {dimension_numbers = #tpu.dot_dimension_numbers<[1], [0], [0], [1], [0, 0, 1, 1], [], []>} : vector<16x32xf32>, vector<32x96xf32>, vector<16x96xf32> -> vector<16x96xf32>
    %188 = vector.broadcast %179 : vector<1x96xf32> to vector<16x96xf32>
    %189 = arith.addf %187, %188 : vector<16x96xf32>
    %190 = vector.extract_strided_slice %189 {offsets = [0, 0], sizes = [16, 8], strides = [1, 1]} : vector<16x96xf32> to vector<16x8xf32>
    %191 = vector.extract_strided_slice %189 {offsets = [0, 32], sizes = [16, 8], strides = [1, 1]} : vector<16x96xf32> to vector<16x8xf32>
    %192 = vector.extract_strided_slice %189 {offsets = [0, 64], sizes = [16, 8], strides = [1, 1]} : vector<16x96xf32> to vector<16x8xf32>
    %cst_75 = arith.constant dense<0.000000e+00> : vector<16x16xf32>
    %193 = tpu.matmul %190, %191, %cst_75 {dimension_numbers = #tpu.dot_dimension_numbers<[1], [1], [0], [0], [0, 0, 1, 0], [], []>} : vector<16x8xf32>, vector<16x8xf32>, vector<16x16xf32> -> vector<16x16xf32>
    %cst_76 = arith.constant 0.353553385 : f32
    %194 = vector.broadcast %cst_76 : f32 to vector<16x16xf32>
    %195 = arith.mulf %193, %194 : vector<16x16xf32>
    %196 = arith.addf %195, %15 : vector<16x16xf32>
    %cst_77 = arith.constant dense<0xFF800000> : vector<16xf32>
    %197 = vector.multi_reduction <maximumf>, %196, %cst_77 [1] : vector<16x16xf32> to vector<16xf32>
    %198 = vector.shape_cast %197 : vector<16xf32> to vector<16x1xf32>
    %199 = vector.broadcast %198 : vector<16x1xf32> to vector<16x16xf32>
    %200 = arith.subf %196, %199 : vector<16x16xf32>
    %201 = math.exp %200 : vector<16x16xf32>
    %cst_78 = arith.constant dense<0.000000e+00> : vector<16xf32>
    %202 = vector.multi_reduction <add>, %201, %cst_78 [1] : vector<16x16xf32> to vector<16xf32>
    %203 = vector.shape_cast %202 : vector<16xf32> to vector<16x1xf32>
    %204 = tpu.reciprocal %203 {approx = true} : vector<16x1xf32> -> vector<16x1xf32>
    %205 = vector.broadcast %204 : vector<16x1xf32> to vector<16x16xf32>
    %206 = arith.mulf %201, %205 : vector<16x16xf32>
    %cst_79 = arith.constant dense<0.000000e+00> : vector<16x8xf32>
    %207 = tpu.matmul %206, %192, %cst_79 {dimension_numbers = #tpu.dot_dimension_numbers<[1], [0], [0], [1], [0, 0, 1, 1], [], []>} : vector<16x16xf32>, vector<16x8xf32>, vector<16x8xf32> -> vector<16x8xf32>
    %208 = vector.extract_strided_slice %189 {offsets = [0, 8], sizes = [16, 8], strides = [1, 1]} : vector<16x96xf32> to vector<16x8xf32>
    %209 = vector.extract_strided_slice %189 {offsets = [0, 40], sizes = [16, 8], strides = [1, 1]} : vector<16x96xf32> to vector<16x8xf32>
    %210 = vector.extract_strided_slice %189 {offsets = [0, 72], sizes = [16, 8], strides = [1, 1]} : vector<16x96xf32> to vector<16x8xf32>
    %cst_80 = arith.constant dense<0.000000e+00> : vector<16x16xf32>
    %211 = tpu.matmul %208, %209, %cst_80 {dimension_numbers = #tpu.dot_dimension_numbers<[1], [1], [0], [0], [0, 0, 1, 0], [], []>} : vector<16x8xf32>, vector<16x8xf32>, vector<16x16xf32> -> vector<16x16xf32>
    %cst_81 = arith.constant 0.353553385 : f32
    %212 = vector.broadcast %cst_81 : f32 to vector<16x16xf32>
    %213 = arith.mulf %211, %212 : vector<16x16xf32>
    %214 = arith.addf %213, %15 : vector<16x16xf32>
    %cst_82 = arith.constant dense<0xFF800000> : vector<16xf32>
    %215 = vector.multi_reduction <maximumf>, %214, %cst_82 [1] : vector<16x16xf32> to vector<16xf32>
    %216 = vector.shape_cast %215 : vector<16xf32> to vector<16x1xf32>
    %217 = vector.broadcast %216 : vector<16x1xf32> to vector<16x16xf32>
    %218 = arith.subf %214, %217 : vector<16x16xf32>
    %219 = math.exp %218 : vector<16x16xf32>
    %cst_83 = arith.constant dense<0.000000e+00> : vector<16xf32>
    %220 = vector.multi_reduction <add>, %219, %cst_83 [1] : vector<16x16xf32> to vector<16xf32>
    %221 = vector.shape_cast %220 : vector<16xf32> to vector<16x1xf32>
    %222 = tpu.reciprocal %221 {approx = true} : vector<16x1xf32> -> vector<16x1xf32>
    %223 = vector.broadcast %222 : vector<16x1xf32> to vector<16x16xf32>
    %224 = arith.mulf %219, %223 : vector<16x16xf32>
    %cst_84 = arith.constant dense<0.000000e+00> : vector<16x8xf32>
    %225 = tpu.matmul %224, %210, %cst_84 {dimension_numbers = #tpu.dot_dimension_numbers<[1], [0], [0], [1], [0, 0, 1, 1], [], []>} : vector<16x16xf32>, vector<16x8xf32>, vector<16x8xf32> -> vector<16x8xf32>
    %226 = vector.extract_strided_slice %189 {offsets = [0, 16], sizes = [16, 8], strides = [1, 1]} : vector<16x96xf32> to vector<16x8xf32>
    %227 = vector.extract_strided_slice %189 {offsets = [0, 48], sizes = [16, 8], strides = [1, 1]} : vector<16x96xf32> to vector<16x8xf32>
    %228 = vector.extract_strided_slice %189 {offsets = [0, 80], sizes = [16, 8], strides = [1, 1]} : vector<16x96xf32> to vector<16x8xf32>
    %cst_85 = arith.constant dense<0.000000e+00> : vector<16x16xf32>
    %229 = tpu.matmul %226, %227, %cst_85 {dimension_numbers = #tpu.dot_dimension_numbers<[1], [1], [0], [0], [0, 0, 1, 0], [], []>} : vector<16x8xf32>, vector<16x8xf32>, vector<16x16xf32> -> vector<16x16xf32>
    %cst_86 = arith.constant 0.353553385 : f32
    %230 = vector.broadcast %cst_86 : f32 to vector<16x16xf32>
    %231 = arith.mulf %229, %230 : vector<16x16xf32>
    %232 = arith.addf %231, %15 : vector<16x16xf32>
    %cst_87 = arith.constant dense<0xFF800000> : vector<16xf32>
    %233 = vector.multi_reduction <maximumf>, %232, %cst_87 [1] : vector<16x16xf32> to vector<16xf32>
    %234 = vector.shape_cast %233 : vector<16xf32> to vector<16x1xf32>
    %235 = vector.broadcast %234 : vector<16x1xf32> to vector<16x16xf32>
    %236 = arith.subf %232, %235 : vector<16x16xf32>
    %237 = math.exp %236 : vector<16x16xf32>
    %cst_88 = arith.constant dense<0.000000e+00> : vector<16xf32>
    %238 = vector.multi_reduction <add>, %237, %cst_88 [1] : vector<16x16xf32> to vector<16xf32>
    %239 = vector.shape_cast %238 : vector<16xf32> to vector<16x1xf32>
    %240 = tpu.reciprocal %239 {approx = true} : vector<16x1xf32> -> vector<16x1xf32>
    %241 = vector.broadcast %240 : vector<16x1xf32> to vector<16x16xf32>
    %242 = arith.mulf %237, %241 : vector<16x16xf32>
    %cst_89 = arith.constant dense<0.000000e+00> : vector<16x8xf32>
    %243 = tpu.matmul %242, %228, %cst_89 {dimension_numbers = #tpu.dot_dimension_numbers<[1], [0], [0], [1], [0, 0, 1, 1], [], []>} : vector<16x16xf32>, vector<16x8xf32>, vector<16x8xf32> -> vector<16x8xf32>
    %244 = vector.extract_strided_slice %189 {offsets = [0, 24], sizes = [16, 8], strides = [1, 1]} : vector<16x96xf32> to vector<16x8xf32>
    %245 = vector.extract_strided_slice %189 {offsets = [0, 56], sizes = [16, 8], strides = [1, 1]} : vector<16x96xf32> to vector<16x8xf32>
    %246 = vector.extract_strided_slice %189 {offsets = [0, 88], sizes = [16, 8], strides = [1, 1]} : vector<16x96xf32> to vector<16x8xf32>
    %cst_90 = arith.constant dense<0.000000e+00> : vector<16x16xf32>
    %247 = tpu.matmul %244, %245, %cst_90 {dimension_numbers = #tpu.dot_dimension_numbers<[1], [1], [0], [0], [0, 0, 1, 0], [], []>} : vector<16x8xf32>, vector<16x8xf32>, vector<16x16xf32> -> vector<16x16xf32>
    %cst_91 = arith.constant 0.353553385 : f32
    %248 = vector.broadcast %cst_91 : f32 to vector<16x16xf32>
    %249 = arith.mulf %247, %248 : vector<16x16xf32>
    %250 = arith.addf %249, %15 : vector<16x16xf32>
    %cst_92 = arith.constant dense<0xFF800000> : vector<16xf32>
    %251 = vector.multi_reduction <maximumf>, %250, %cst_92 [1] : vector<16x16xf32> to vector<16xf32>
    %252 = vector.shape_cast %251 : vector<16xf32> to vector<16x1xf32>
    %253 = vector.broadcast %252 : vector<16x1xf32> to vector<16x16xf32>
    %254 = arith.subf %250, %253 : vector<16x16xf32>
    %255 = math.exp %254 : vector<16x16xf32>
    %cst_93 = arith.constant dense<0.000000e+00> : vector<16xf32>
    %256 = vector.multi_reduction <add>, %255, %cst_93 [1] : vector<16x16xf32> to vector<16xf32>
    %257 = vector.shape_cast %256 : vector<16xf32> to vector<16x1xf32>
    %258 = tpu.reciprocal %257 {approx = true} : vector<16x1xf32> -> vector<16x1xf32>
    %259 = vector.broadcast %258 : vector<16x1xf32> to vector<16x16xf32>
    %260 = arith.mulf %255, %259 : vector<16x16xf32>
    %cst_94 = arith.constant dense<0.000000e+00> : vector<16x8xf32>
    %261 = tpu.matmul %260, %246, %cst_94 {dimension_numbers = #tpu.dot_dimension_numbers<[1], [0], [0], [1], [0, 0, 1, 1], [], []>} : vector<16x16xf32>, vector<16x8xf32>, vector<16x8xf32> -> vector<16x8xf32>
    %262 = tpu.concatenate %207, %225, %243, %261 in 1 : vector<16x8xf32>, vector<16x8xf32>, vector<16x8xf32>, vector<16x8xf32> -> vector<16x32xf32>
    %cst_95 = arith.constant dense<0.000000e+00> : vector<16x32xf32>
    %263 = tpu.matmul %262, %172, %cst_95 {dimension_numbers = #tpu.dot_dimension_numbers<[1], [0], [0], [1], [0, 0, 1, 1], [], []>} : vector<16x32xf32>, vector<32x32xf32>, vector<16x32xf32> -> vector<16x32xf32>
    %264 = vector.broadcast %181 : vector<1x32xf32> to vector<16x32xf32>
    %265 = arith.addf %263, %264 : vector<16x32xf32>
    %266 = arith.addf %265, %168 : vector<16x32xf32>
    %cst_96 = arith.constant dense<0.000000e+00> : vector<16xf32>
    %267 = vector.multi_reduction <add>, %266, %cst_96 [1] : vector<16x32xf32> to vector<16xf32>
    %268 = vector.shape_cast %267 : vector<16xf32> to vector<16x1xf32>
    %cst_97 = arith.constant 3.200000e+01 : f32
    %269 = vector.broadcast %cst_97 : f32 to vector<16x1xf32>
    %270 = arith.divf %268, %269 : vector<16x1xf32>
    %271 = vector.broadcast %270 : vector<16x1xf32> to vector<16x32xf32>
    %272 = arith.subf %266, %271 : vector<16x32xf32>
    %273 = arith.mulf %272, %272 : vector<16x32xf32>
    %cst_98 = arith.constant dense<0.000000e+00> : vector<16xf32>
    %274 = vector.multi_reduction <add>, %273, %cst_98 [1] : vector<16x32xf32> to vector<16xf32>
    %275 = vector.shape_cast %274 : vector<16xf32> to vector<16x1xf32>
    %cst_99 = arith.constant 3.200000e+01 : f32
    %276 = vector.broadcast %cst_99 : f32 to vector<16x1xf32>
    %277 = arith.divf %275, %276 : vector<16x1xf32>
    %278 = math.sqrt %277 : vector<16x1xf32>
    %279 = vector.broadcast %270 : vector<16x1xf32> to vector<16x32xf32>
    %280 = arith.subf %266, %279 : vector<16x32xf32>
    %cst_100 = arith.constant 9.99999997E-7 : f32
    %281 = vector.broadcast %cst_100 : f32 to vector<16x1xf32>
    %282 = arith.addf %278, %281 : vector<16x1xf32>
    %283 = math.rsqrt %282 : vector<16x1xf32>
    %284 = vector.broadcast %283 : vector<16x1xf32> to vector<16x32xf32>
    %285 = arith.mulf %280, %284 : vector<16x32xf32>
    %286 = vector.broadcast %182 : vector<1x32xf32> to vector<16x32xf32>
    %287 = arith.mulf %286, %285 : vector<16x32xf32>
    %288 = vector.broadcast %183 : vector<1x32xf32> to vector<16x32xf32>
    %289 = arith.addf %287, %288 : vector<16x32xf32>
    %cst_101 = arith.constant dense<0.000000e+00> : vector<16x64xf32>
    %290 = tpu.matmul %289, %174, %cst_101 {dimension_numbers = #tpu.dot_dimension_numbers<[1], [0], [0], [1], [0, 0, 1, 1], [], []>} : vector<16x32xf32>, vector<32x64xf32>, vector<16x64xf32> -> vector<16x64xf32>
    %291 = vector.broadcast %180 : vector<1x64xf32> to vector<16x64xf32>
    %292 = arith.addf %290, %291 : vector<16x64xf32>
    %cst_102 = arith.constant 0.000000e+00 : f32
    %293 = vector.broadcast %cst_102 : f32 to vector<16x64xf32>
    %294 = arith.maximumf %292, %293 : vector<16x64xf32>
    %cst_103 = arith.constant dense<0.000000e+00> : vector<16x32xf32>
    %295 = tpu.matmul %294, %176, %cst_103 {dimension_numbers = #tpu.dot_dimension_numbers<[1], [0], [0], [1], [0, 0, 1, 1], [], []>} : vector<16x64xf32>, vector<64x32xf32>, vector<16x32xf32> -> vector<16x32xf32>
    %296 = vector.broadcast %184 : vector<1x32xf32> to vector<16x32xf32>
    %297 = arith.addf %295, %296 : vector<16x32xf32>
    %298 = arith.addf %297, %289 : vector<16x32xf32>
    %cst_104 = arith.constant dense<0.000000e+00> : vector<16xf32>
    %299 = vector.multi_reduction <add>, %298, %cst_104 [1] : vector<16x32xf32> to vector<16xf32>
    %300 = vector.shape_cast %299 : vector<16xf32> to vector<16x1xf32>
    %cst_105 = arith.constant 3.200000e+01 : f32
    %301 = vector.broadcast %cst_105 : f32 to vector<16x1xf32>
    %302 = arith.divf %300, %301 : vector<16x1xf32>
    %303 = vector.broadcast %302 : vector<16x1xf32> to vector<16x32xf32>
    %304 = arith.subf %298, %303 : vector<16x32xf32>
    %305 = arith.mulf %304, %304 : vector<16x32xf32>
    %cst_106 = arith.constant dense<0.000000e+00> : vector<16xf32>
    %306 = vector.multi_reduction <add>, %305, %cst_106 [1] : vector<16x32xf32> to vector<16xf32>
    %307 = vector.shape_cast %306 : vector<16xf32> to vector<16x1xf32>
    %cst_107 = arith.constant 3.200000e+01 : f32
    %308 = vector.broadcast %cst_107 : f32 to vector<16x1xf32>
    %309 = arith.divf %307, %308 : vector<16x1xf32>
    %310 = math.sqrt %309 : vector<16x1xf32>
    %311 = vector.broadcast %302 : vector<16x1xf32> to vector<16x32xf32>
    %312 = arith.subf %298, %311 : vector<16x32xf32>
    %cst_108 = arith.constant 9.99999997E-7 : f32
    %313 = vector.broadcast %cst_108 : f32 to vector<16x1xf32>
    %314 = arith.addf %310, %313 : vector<16x1xf32>
    %315 = math.rsqrt %314 : vector<16x1xf32>
    %316 = vector.broadcast %315 : vector<16x1xf32> to vector<16x32xf32>
    %317 = arith.mulf %312, %316 : vector<16x32xf32>
    %318 = vector.broadcast %185 : vector<1x32xf32> to vector<16x32xf32>
    %319 = arith.mulf %318, %317 : vector<16x32xf32>
    %320 = vector.broadcast %186 : vector<1x32xf32> to vector<16x32xf32>
    %321 = arith.addf %319, %320 : vector<16x32xf32>
    %c0_109 = arith.constant 0 : index
    %c0_110 = arith.constant 0 : index
    %322 = vector.load %arg9[%c0_109, %c0_110] : memref<16x32xf32, #tpu.memory_space<vmem>>, vector<16x32xf32>
    tpu.vector_store %arg9[%c0_109, %c0_110], %321 {strides = array<i32>} : memref<16x32xf32, #tpu.memory_space<vmem>>, vector<16x32xf32>,
    return
  }
}

</mosaic_0001>

<llo_original>
// kernel: encoder_forward.1
$region0: #{encoder_forward.1}
  #allocation0 [shape = 'u32[]', space=smem, size = 0x4, offset = 0x4, fixed_abs, tag = 'smem constant byte address 0x4 - core index']
  #allocation1 [shape = 'u32[72,128]{1,0:T(1,128)}', space=vmem, size = 0x9000, scoped, tag = 'internal scratch']
  %s0 = inlined_call_operand.vmem [shape: s32[16,1], index: 0, kind: input, shape index: {}]
  %s1 = inlined_call_operand.vmem [shape: f32[50,32], index: 1, kind: input, shape index: {}]
  %s2 = inlined_call_operand.vmem [shape: f32[16,32], index: 2, kind: input, shape index: {}]
  %s3 = inlined_call_operand.vmem [shape: f32[16,16], index: 3, kind: input, shape index: {}]
  %s4 = inlined_call_operand.vmem [shape: f32[2,32,96], index: 4, kind: input, shape index: {}]
  %s5 = inlined_call_operand.vmem [shape: f32[2,32,32], index: 5, kind: input, shape index: {}]
  %s6 = inlined_call_operand.vmem [shape: f32[2,32,64], index: 6, kind: input, shape index: {}]
  %s7 = inlined_call_operand.vmem [shape: f32[2,64,32], index: 7, kind: input, shape index: {}]
  %s8 = inlined_call_operand.vmem [shape: f32[2,8,128], index: 8, kind: input, shape index: {}]
  %s9 = inlined_call_operand.hbm [shape: f32[16,32], index: 9, kind: output, shape index: {}]
  %s10 = sld [smem:[#allocation0]]
  $region46: #{encoder_forward.1} parent=0
    _
  %s12 = ssub.s32 1, %s10
  %s13 = scalar_select 0, %s12, %s10
  $region1: #{encoder_forward.1} parent=0
    #allocation2 [shape = 'u8[8192]{0}', space=vmem, size = 0x2000, scoped, tag = 'output window, operand 0, single buffered']
    #allocation3 [shape = 's32[1]{0}', space=sflag, size = 0x4, scoped, tag = 'scoped memory for encoder_forward.1']
    %14 = vsyncpa [#allocation3], 0
    // Predicated region
    $region2: #{encoder_forward.1} parent=1 // pred_check
      _
    $region3: #{encoder_forward.1} parent=1 // pred_check_branch
      %16 = sbr.rel (0) target = $region5
    $region4: #{encoder_forward.1} parent=1 // pred_region
      _
    $region5: #{encoder_forward.1} parent=1 // pred_fallthru
      _
    // Predicated region
    $region6: #{encoder_forward.1} parent=1 // pred_check
      _
    $region7: #{encoder_forward.1} parent=1 // pred_check_branch
      %18 = sbr.rel (0) target = $region9
    $region8: #{encoder_forward.1} parent=1 // pred_region
      _
    $region9: #{encoder_forward.1} parent=1 // pred_fallthru
      _
    // Predicated region
    $region10: #{encoder_forward.1} parent=1 // pred_check
      _
    $region11: #{encoder_forward.1} parent=1 // pred_check_branch
      %20 = sbr.rel (0) target = $region13
    $region12: #{encoder_forward.1} parent=1 // pred_region
      _
    $region13: #{encoder_forward.1} parent=1 // pred_fallthru
      _
    // Predicated region
    $region14: #{encoder_forward.1} parent=1 // pred_check
      _
    $region15: #{encoder_forward.1} parent=1 // pred_check_branch
      %22 = sbr.rel (0) target = $region17
    $region16: #{encoder_forward.1} parent=1 // pred_region
      _
    $region17: #{encoder_forward.1} parent=1 // pred_fallthru
      _
    // Predicated region
    $region18: #{encoder_forward.1} parent=1 // pred_check
      _
    $region19: #{encoder_forward.1} parent=1 // pred_check_branch
      %24 = sbr.rel (0) target = $region21
    $region20: #{encoder_forward.1} parent=1 // pred_region
      _
    $region21: #{encoder_forward.1} parent=1 // pred_fallthru
      _
    // Predicated region
    $region22: #{encoder_forward.1} parent=1 // pred_check
      _
    $region23: #{encoder_forward.1} parent=1 // pred_check_branch
      %26 = sbr.rel (0) target = $region25
    $region24: #{encoder_forward.1} parent=1 // pred_region
      _
    $region25: #{encoder_forward.1} parent=1 // pred_fallthru
      _
    // Predicated region
    $region26: #{encoder_forward.1} parent=1 // pred_check
      _
    $region27: #{encoder_forward.1} parent=1 // pred_check_branch
      %28 = sbr.rel (0) target = $region29
    $region28: #{encoder_forward.1} parent=1 // pred_region
      _
    $region29: #{encoder_forward.1} parent=1 // pred_fallthru
      _
    // Predicated region
    $region30: #{encoder_forward.1} parent=1 // pred_check
      _
    $region31: #{encoder_forward.1} parent=1 // pred_check_branch
      %30 = sbr.rel (0) target = $region33
    $region32: #{encoder_forward.1} parent=1 // pred_region
      _
    $region33: #{encoder_forward.1} parent=1 // pred_fallthru
      _
    // Predicated region
    $region34: #{encoder_forward.1} parent=1 // pred_check
      _
    $region35: #{encoder_forward.1} parent=1 // pred_check_branch
      %32 = sbr.rel (0) target = $region37
    $region36: #{encoder_forward.1} parent=1 // pred_region
      _
    $region37: #{encoder_forward.1} parent=1 // pred_fallthru
      _
    %v33 = vld [vmem:[%s0] sm:$0xff]
    %v34 = vld [vmem:[%s0 + $0x8] sm:$0xff]
    %v35 = vlaneseq
    %v36 = vand.u32 %v35, 127
    %37 = vset.pattern.permute.xlu0 0
    %38 = vperm.xlu0 %37, %v33
    %v39 = vpop.permute.xlu0 %38
    %40 = vset.pattern.permute.xlu0 0
    %41 = vperm.xlu0 %40, %v34
    %v42 = vpop.permute.xlu0 %41
    %vm43 = vcmp.eq.s32.totalorder %v36, %v39
    %vm44 = vcmp.eq.s32.totalorder %v36, %v42
    %v45 = vsel %vm43, 1, 0
    %v46 = vsel %vm44, 1, 0
    %v47 = vcvt.s32.f32 %v45
    %v48 = vcvt.s32.f32 %v46
    %v49 = vld [vmem:[%s1] sm:$0xff]
    %v50 = vld [vmem:[%s1 + $0x8] sm:$0xff]
    %v51 = vld [vmem:[%s1 + $0x10] sm:$0xff]
    %v52 = vld [vmem:[%s1 + $0x18] sm:$0xff]
    %v53 = vld [vmem:[%s1 + $0x20] sm:$0xff]
    %v54 = vld [vmem:[%s1 + $0x28] sm:$0xff]
    %v55 = vld [vmem:[%s1 + $0x30] sm:$0x3]
    %v56 = vld [vmem:[%s2] sm:$0xff]
    %v57 = vld [vmem:[%s2 + $0x8] sm:$0xff]
    %vm58 = vcmask 408576
    %v60 = vsel %vm58, %v47, 0
    %v63 = vsel %vm58, %v48, 0
    %vm65 = vcmask 1041408
    %v67 = vsel %vm65, %v55, 0
    %69 = vmatpush.msra.mxu0 0.0
    %70 = vmatpush.msra.mxu0 0.0
    %71 = vmatpush.msra.mxu0 0.0
    %72 = vmatpush.msra.mxu0 0.0
    %73 = vmatpush.msra.mxu0 0.0
    %74 = vmatpush.msra.mxu0 0.0
    %75 = vmatpush.msra.mxu0 0.0
    %76 = vmatpush.msra.mxu0 0.0
    %77 = vmatpush.msra.mxu0 0.0
    %78 = vmatpush.msra.mxu0 %v67
    %79 = vmatpush.msra.mxu0 %v54
    %80 = vmatpush.msra.mxu0 %v53
    %81 = vmatpush.msra.mxu0 %v52
    %82 = vmatpush.msra.mxu0 %v51
    %83 = vmatpush.msra.mxu0 %v50
    %84 = vmatpush.msra.mxu0 %v49
    %85 = vmatmul.f32.gmra.mxu0 %v60
    %v86 = vpop.f32.mrf.mxu0
    %v87 = vadd.f32 %v56, %v86
    %88 = vmatmul.f32.gmra.mxu0 %v63
    %v89 = vpop.f32.mrf.mxu0
    %v90 = vadd.f32 %v57, %v89
    %91 = vdwg.mxu0
    %v92 = vld [vmem:[%s3] sm:$0xff]
    %v93 = vld [vmem:[%s3 + $0x8] sm:$0xff]
    %vm94 = vcmp.eq.f32.partialorder %v92, 0.0
    %vm95 = vcmp.eq.f32.partialorder %v93, 0.0
    %v96 = vsel %vm94, -1e+09, 0.0
    %v97 = vsel %vm95, -1e+09, 0.0
    %v98 = vld [vmem:[%s4] sm:$0xff]
    %v99 = vld [vmem:[%s4 + $0x8] sm:$0xff]
    %v100 = vld [vmem:[%s4 + $0x10] sm:$0xff]
    %v101 = vld [vmem:[%s4 + $0x18] sm:$0xff]
    %v102 = vld [vmem:[%s5] sm:$0xff]
    %v103 = vld [vmem:[%s5 + $0x8] sm:$0xff]
    %v104 = vld [vmem:[%s5 + $0x10] sm:$0xff]
    %v105 = vld [vmem:[%s5 + $0x18] sm:$0xff]
    %v106 = vld [vmem:[%s6] sm:$0xff]
    %v107 = vld [vmem:[%s6 + $0x8] sm:$0xff]
    %v108 = vld [vmem:[%s6 + $0x10] sm:$0xff]
    %v109 = vld [vmem:[%s6 + $0x18] sm:$0xff]
    %v110 = vld [vmem:[%s7] sm:$0xff]
    %v111 = vld [vmem:[%s7 + $0x8] sm:$0xff]
    %v112 = vld [vmem:[%s7 + $0x10] sm:$0xff]
    %v113 = vld [vmem:[%s7 + $0x18] sm:$0xff]
    %v114 = vld [vmem:[%s7 + $0x20] sm:$0xff]
    %v115 = vld [vmem:[%s7 + $0x28] sm:$0xff]
    %v116 = vld [vmem:[%s7 + $0x30] sm:$0xff]
    %v117 = vld [vmem:[%s7 + $0x38] sm:$0xff]
    %v118 = vld [vmem:[%s8] sm:$0xff]
    %v119 = vperm.slane %v118, 0
    %vm120 = vcmask 261120
    %v122 = vsel %vm120, %v87, 0
    %v125 = vsel %vm120, %v90, 0
    %127 = vmatpush.msra.mxu0 0.0
    %128 = vmatpush.msra.mxu0 0.0
    %129 = vmatpush.msra.mxu0 0.0
    %130 = vmatpush.msra.mxu0 0.0
    %131 = vmatpush.msra.mxu0 0.0
    %132 = vmatpush.msra.mxu0 0.0
    %133 = vmatpush.msra.mxu0 0.0
    %134 = vmatpush.msra.mxu0 0.0
    %135 = vmatpush.msra.mxu0 0.0
    %136 = vmatpush.msra.mxu0 0.0
    %137 = vmatpush.msra.mxu0 0.0
    %138 = vmatpush.msra.mxu0 0.0
    %139 = vmatpush.msra.mxu0 %v101
    %140 = vmatpush.msra.mxu0 %v100
    %141 = vmatpush.msra.mxu0 %v99
    %142 = vmatpush.msra.mxu0 %v98
    %143 = vmatmul.f32.gmra.mxu0 %v122
    %v144 = vpop.f32.mrf.mxu0
    %v145 = vadd.f32 %v119, %v144
    %146 = vmatmul.f32.gmra.mxu0 %v125
    %v147 = vpop.f32.mrf.mxu0
    %v148 = vadd.f32 %v119, %v147
    %149 = vdwg.mxu0
    %152 = vrot.lane.b32.xlu0 %v145, 96
    %v153 = vpop.permute.xlu0 %152
    %154 = vrot.lane.b32.xlu0 %v148, 96
    %v155 = vpop.permute.xlu0 %154
    %vm156 = vcmask 64512
    %v157 = vsel %vm156, %v145, 0
    %v159 = vsel %vm156, %v148, 0
    %v161 = vsel %vm156, %v153, 0
    %v163 = vsel %vm156, %v155, 0
    %165 = vmatpush.xpose.msra.mxu0 0.0
    %166 = vmatpush.xpose.msra.mxu0 0.0
    %167 = vmatpush.xpose.msra.mxu0 0.0
    %168 = vmatpush.xpose.msra.mxu0 0.0
    %169 = vmatpush.xpose.msra.mxu0 0.0
    %170 = vmatpush.xpose.msra.mxu0 0.0
    %171 = vmatpush.xpose.msra.mxu0 0.0
    %172 = vmatpush.xpose.msra.mxu0 0.0
    %173 = vmatpush.xpose.msra.mxu0 0.0
    %174 = vmatpush.xpose.msra.mxu0 0.0
    %175 = vmatpush.xpose.msra.mxu0 0.0
    %176 = vmatpush.xpose.msra.mxu0 0.0
    %177 = vmatpush.xpose.msra.mxu0 0.0
    %178 = vmatpush.xpose.msra.mxu0 0.0
    %179 = vmatpush.xpose.msra.mxu0 %v163
    %180 = vmatpush.xpose.msra.mxu0 %v161
    %181 = vmatmul.f32.gmra.mxu0 %v157
    %v182 = vpop.f32.mrf.mxu0
    %v183 = vadd.f32 0.0, %v182
    %184 = vmatmul.f32.gmra.mxu0 %v159
    %v185 = vpop.f32.mrf.mxu0
    %v186 = vadd.f32 0.0, %v185
    %187 = vdwg.mxu0
    %v188 = vmul.f32 %v183, 0.35355338
    %v189 = vmul.f32 %v186, 0.35355338
    %v190 = vadd.f32 %v188, %v96
    %v191 = vadd.f32 %v189, %v97
    %vm192 = vcmask 130048
    %v193 = vsel %vm192, %v190, -inf
    %194 = vmax.xlane.f32.xlu0 %v193
    %v195 = vpop.xlane.xlu0 %194
    %v196 = vsel %vm192, %v191, -inf
    %197 = vmax.xlane.f32.xlu0 %v196
    %v198 = vpop.xlane.xlu0 %197
    %v199 = vsub.f32 %v190, %v195
    %v200 = vsub.f32 %v191, %v198
    %v201 = vmul.f32 %v199, 1.442695
    %v202 = vpow.pop %v201
    %v203 = vmul.f32 %v200, 1.442695
    %v204 = vpow.pop %v203
    %v205 = vsel %vm192, %v202, 0.0
    %206 = vadd.xlane.f32.xlu0 %v205
    %v207 = vpop.xlane.xlu0 %206
    %v208 = vsel %vm192, %v204, 0.0
    %209 = vadd.xlane.f32.xlu0 %v208
    %v210 = vpop.xlane.xlu0 %209
    %v211 = vrcp.pop %v207
    %v212 = vrcp.pop %v210
    %v213 = vmul.f32 %v202, %v211
    %v214 = vmul.f32 %v204, %v212
    %215 = vrot.lane.b32.xlu0 %v145, 64
    %v216 = vpop.permute.xlu0 %215
    %217 = vrot.lane.b32.xlu0 %v148, 64
    %v218 = vpop.permute.xlu0 %217
    %v222 = vsel %vm192, %v213, 0
    %v225 = vsel %vm192, %v214, 0
    %227 = vmatpush.msra.mxu0 0.0
    %228 = vmatpush.msra.mxu0 0.0
    %229 = vmatpush.msra.mxu0 0.0
    %230 = vmatpush.msra.mxu0 0.0
    %231 = vmatpush.msra.mxu0 0.0
    %232 = vmatpush.msra.mxu0 0.0
    %233 = vmatpush.msra.mxu0 0.0
    %234 = vmatpush.msra.mxu0 0.0
    %235 = vmatpush.msra.mxu0 0.0
    %236 = vmatpush.msra.mxu0 0.0
    %237 = vmatpush.msra.mxu0 0.0
    %238 = vmatpush.msra.mxu0 0.0
    %239 = vmatpush.msra.mxu0 0.0
    %240 = vmatpush.msra.mxu0 0.0
    %241 = vmatpush.msra.mxu0 %v218
    %242 = vmatpush.msra.mxu0 %v216
    %243 = vmatmul.f32.gmra.mxu0 %v222
    %v244 = vpop.f32.mrf.mxu0
    %v245 = vadd.f32 0.0, %v244
    %246 = vmatmul.f32.gmra.mxu0 %v225
    %v247 = vpop.f32.mrf.mxu0
    %v248 = vadd.f32 0.0, %v247
    %249 = vdwg.mxu0
    %250 = vrot.lane.b32.xlu0 %v145, 120
    %v251 = vpop.permute.xlu0 %250
    %252 = vrot.lane.b32.xlu0 %v148, 120
    %v253 = vpop.permute.xlu0 %252
    %254 = vrot.lane.b32.xlu0 %v145, 88
    %v255 = vpop.permute.xlu0 %254
    %256 = vrot.lane.b32.xlu0 %v148, 88
    %v257 = vpop.permute.xlu0 %256
    %v258 = vsel %vm156, %v251, 0
    %v260 = vsel %vm156, %v253, 0
    %v262 = vsel %vm156, %v255, 0
    %v264 = vsel %vm156, %v257, 0
    %266 = vmatpush.xpose.msra.mxu0 0.0
    %267 = vmatpush.xpose.msra.mxu0 0.0
    %268 = vmatpush.xpose.msra.mxu0 0.0
    %269 = vmatpush.xpose.msra.mxu0 0.0
    %270 = vmatpush.xpose.msra.mxu0 0.0
    %271 = vmatpush.xpose.msra.mxu0 0.0
    %272 = vmatpush.xpose.msra.mxu0 0.0
    %273 = vmatpush.xpose.msra.mxu0 0.0
    %274 = vmatpush.xpose.msra.mxu0 0.0
    %275 = vmatpush.xpose.msra.mxu0 0.0
    %276 = vmatpush.xpose.msra.mxu0 0.0
    %277 = vmatpush.xpose.msra.mxu0 0.0
    %278 = vmatpush.xpose.msra.mxu0 0.0
    %279 = vmatpush.xpose.msra.mxu0 0.0
    %280 = vmatpush.xpose.msra.mxu0 %v264
    %281 = vmatpush.xpose.msra.mxu0 %v262
    %282 = vmatmul.f32.gmra.mxu0 %v258
    %v283 = vpop.f32.mrf.mxu0
    %v284 = vadd.f32 0.0, %v283
    %285 = vmatmul.f32.gmra.mxu0 %v260
    %v286 = vpop.f32.mrf.mxu0
    %v287 = vadd.f32 0.0, %v286
    %288 = vdwg.mxu0
    %v289 = vmul.f32 %v284, 0.35355338
    %v290 = vmul.f32 %v287, 0.35355338
    %v291 = vadd.f32 %v289, %v96
    %v292 = vadd.f32 %v290, %v97
    %v293 = vsel %vm192, %v291, -inf
    %294 = vmax.xlane.f32.xlu0 %v293
    %v295 = vpop.xlane.xlu0 %294
    %v296 = vsel %vm192, %v292, -inf
    %297 = vmax.xlane.f32.xlu0 %v296
    %v298 = vpop.xlane.xlu0 %297
    %v299 = vsub.f32 %v291, %v295
    %v300 = vsub.f32 %v292, %v298
    %v301 = vmul.f32 %v299, 1.442695
    %v302 = vpow.pop %v301
    %v303 = vmul.f32 %v300, 1.442695
    %v304 = vpow.pop %v303
    %v305 = vsel %vm192, %v302, 0.0
    %306 = vadd.xlane.f32.xlu0 %v305
    %v307 = vpop.xlane.xlu0 %306
    %v308 = vsel %vm192, %v304, 0.0
    %309 = vadd.xlane.f32.xlu0 %v308
    %v310 = vpop.xlane.xlu0 %309
    %v311 = vrcp.pop %v307
    %v312 = vrcp.pop %v310
    %v313 = vmul.f32 %v302, %v311
    %v314 = vmul.f32 %v304, %v312
    %315 = vrot.lane.b32.xlu0 %v145, 56
    %v316 = vpop.permute.xlu0 %315
    %317 = vrot.lane.b32.xlu0 %v148, 56
    %v318 = vpop.permute.xlu0 %317
    %v322 = vsel %vm192, %v313, 0
    %v325 = vsel %vm192, %v314, 0
    %327 = vmatpush.msra.mxu0 0.0
    %328 = vmatpush.msra.mxu0 0.0
    %329 = vmatpush.msra.mxu0 0.0
    %330 = vmatpush.msra.mxu0 0.0
    %331 = vmatpush.msra.mxu0 0.0
    %332 = vmatpush.msra.mxu0 0.0
    %333 = vmatpush.msra.mxu0 0.0
    %334 = vmatpush.msra.mxu0 0.0
    %335 = vmatpush.msra.mxu0 0.0
    %336 = vmatpush.msra.mxu0 0.0
    %337 = vmatpush.msra.mxu0 0.0
    %338 = vmatpush.msra.mxu0 0.0
    %339 = vmatpush.msra.mxu0 0.0
    %340 = vmatpush.msra.mxu0 0.0
    %341 = vmatpush.msra.mxu0 %v318
    %342 = vmatpush.msra.mxu0 %v316
    %343 = vmatmul.f32.gmra.mxu0 %v322
    %v344 = vpop.f32.mrf.mxu0
    %v345 = vadd.f32 0.0, %v344
    %346 = vmatmul.f32.gmra.mxu0 %v325
    %v347 = vpop.f32.mrf.mxu0
    %v348 = vadd.f32 0.0, %v347
    %349 = vdwg.mxu0
    %350 = vrot.lane.b32.xlu0 %v145, 112
    %v351 = vpop.permute.xlu0 %350
    %352 = vrot.lane.b32.xlu0 %v148, 112
    %v353 = vpop.permute.xlu0 %352
    %354 = vrot.lane.b32.xlu0 %v145, 80
    %v355 = vpop.permute.xlu0 %354
    %356 = vrot.lane.b32.xlu0 %v148, 80
    %v357 = vpop.permute.xlu0 %356
    %v358 = vsel %vm156, %v351, 0
    %v360 = vsel %vm156, %v353, 0
    %v362 = vsel %vm156, %v355, 0
    %v364 = vsel %vm156, %v357, 0
    %366 = vmatpush.xpose.msra.mxu0 0.0
    %367 = vmatpush.xpose.msra.mxu0 0.0
    %368 = vmatpush.xpose.msra.mxu0 0.0
    %369 = vmatpush.xpose.msra.mxu0 0.0
    %370 = vmatpush.xpose.msra.mxu0 0.0
    %371 = vmatpush.xpose.msra.mxu0 0.0
    %372 = vmatpush.xpose.msra.mxu0 0.0
    %373 = vmatpush.xpose.msra.mxu0 0.0
    %374 = vmatpush.xpose.msra.mxu0 0.0
    %375 = vmatpush.xpose.msra.mxu0 0.0
    %376 = vmatpush.xpose.msra.mxu0 0.0
    %377 = vmatpush.xpose.msra.mxu0 0.0
    %378 = vmatpush.xpose.msra.mxu0 0.0
    %379 = vmatpush.xpose.msra.mxu0 0.0
    %380 = vmatpush.xpose.msra.mxu0 %v364
    %381 = vmatpush.xpose.msra.mxu0 %v362
    %382 = vmatmul.f32.gmra.mxu0 %v358
    %v383 = vpop.f32.mrf.mxu0
    %v384 = vadd.f32 0.0, %v383
    %385 = vmatmul.f32.gmra.mxu0 %v360
    %v386 = vpop.f32.mrf.mxu0
    %v387 = vadd.f32 0.0, %v386
    %388 = vdwg.mxu0
    %v389 = vmul.f32 %v384, 0.35355338
    %v390 = vmul.f32 %v387, 0.35355338
    %v391 = vadd.f32 %v389, %v96
    %v392 = vadd.f32 %v390, %v97
    %v393 = vsel %vm192, %v391, -inf
    %394 = vmax.xlane.f32.xlu0 %v393
    %v395 = vpop.xlane.xlu0 %394
    %v396 = vsel %vm192, %v392, -inf
    %397 = vmax.xlane.f32.xlu0 %v396
    %v398 = vpop.xlane.xlu0 %397
    %v399 = vsub.f32 %v391, %v395
    %v400 = vsub.f32 %v392, %v398
    %v401 = vmul.f32 %v399, 1.442695
    %v402 = vpow.pop %v401
    %v403 = vmul.f32 %v400, 1.442695
    %v404 = vpow.pop %v403
    %v405 = vsel %vm192, %v402, 0.0
    %406 = vadd.xlane.f32.xlu0 %v405
    %v407 = vpop.xlane.xlu0 %406
    %v408 = vsel %vm192, %v404, 0.0
    %409 = vadd.xlane.f32.xlu0 %v408
    %v410 = vpop.xlane.xlu0 %409
    %v411 = vrcp.pop %v407
    %v412 = vrcp.pop %v410
    %v413 = vmul.f32 %v402, %v411
    %v414 = vmul.f32 %v404, %v412
    %415 = vrot.lane.b32.xlu0 %v145, 48
    %v416 = vpop.permute.xlu0 %415
    %417 = vrot.lane.b32.xlu0 %v148, 48
    %v418 = vpop.permute.xlu0 %417
    %v422 = vsel %vm192, %v413, 0
    %v425 = vsel %vm192, %v414, 0
    %427 = vmatpush.msra.mxu0 0.0
    %428 = vmatpush.msra.mxu0 0.0
    %429 = vmatpush.msra.mxu0 0.0
    %430 = vmatpush.msra.mxu0 0.0
    %431 = vmatpush.msra.mxu0 0.0
    %432 = vmatpush.msra.mxu0 0.0
    %433 = vmatpush.msra.mxu0 0.0
    %434 = vmatpush.msra.mxu0 0.0
    %435 = vmatpush.msra.mxu0 0.0
    %436 = vmatpush.msra.mxu0 0.0
    %437 = vmatpush.msra.mxu0 0.0
    %438 = vmatpush.msra.mxu0 0.0
    %439 = vmatpush.msra.mxu0 0.0
    %440 = vmatpush.msra.mxu0 0.0
    %441 = vmatpush.msra.mxu0 %v418
    %442 = vmatpush.msra.mxu0 %v416
    %443 = vmatmul.f32.gmra.mxu0 %v422
    %v444 = vpop.f32.mrf.mxu0
    %v445 = vadd.f32 0.0, %v444
    %446 = vmatmul.f32.gmra.mxu0 %v425
    %v447 = vpop.f32.mrf.mxu0
    %v448 = vadd.f32 0.0, %v447
    %449 = vdwg.mxu0
    %450 = vrot.lane.b32.xlu0 %v145, 104
    %v451 = vpop.permute.xlu0 %450
    %452 = vrot.lane.b32.xlu0 %v148, 104
    %v453 = vpop.permute.xlu0 %452
    %454 = vrot.lane.b32.xlu0 %v145, 72
    %v455 = vpop.permute.xlu0 %454
    %456 = vrot.lane.b32.xlu0 %v148, 72
    %v457 = vpop.permute.xlu0 %456
    %v458 = vsel %vm156, %v451, 0
    %v460 = vsel %vm156, %v453, 0
    %v462 = vsel %vm156, %v455, 0
    %v464 = vsel %vm156, %v457, 0
    %466 = vmatpush.xpose.msra.mxu0 0.0
    %467 = vmatpush.xpose.msra.mxu0 0.0
    %468 = vmatpush.xpose.msra.mxu0 0.0
    %469 = vmatpush.xpose.msra.mxu0 0.0
    %470 = vmatpush.xpose.msra.mxu0 0.0
    %471 = vmatpush.xpose.msra.mxu0 0.0
    %472 = vmatpush.xpose.msra.mxu0 0.0
    %473 = vmatpush.xpose.msra.mxu0 0.0
    %474 = vmatpush.xpose.msra.mxu0 0.0
    %475 = vmatpush.xpose.msra.mxu0 0.0
    %476 = vmatpush.xpose.msra.mxu0 0.0
    %477 = vmatpush.xpose.msra.mxu0 0.0
    %478 = vmatpush.xpose.msra.mxu0 0.0
    %479 = vmatpush.xpose.msra.mxu0 0.0
    %480 = vmatpush.xpose.msra.mxu0 %v464
    %481 = vmatpush.xpose.msra.mxu0 %v462
    %482 = vmatmul.f32.gmra.mxu0 %v458
    %v483 = vpop.f32.mrf.mxu0
    %v484 = vadd.f32 0.0, %v483
    %485 = vmatmul.f32.gmra.mxu0 %v460
    %v486 = vpop.f32.mrf.mxu0
    %v487 = vadd.f32 0.0, %v486
    %488 = vdwg.mxu0
    %v489 = vmul.f32 %v484, 0.35355338
    %v490 = vmul.f32 %v487, 0.35355338
    %v491 = vadd.f32 %v489, %v96
    %v492 = vadd.f32 %v490, %v97
    %v493 = vsel %vm192, %v491, -inf
    %494 = vmax.xlane.f32.xlu0 %v493
    %v495 = vpop.xlane.xlu0 %494
    %v496 = vsel %vm192, %v492, -inf
    %497 = vmax.xlane.f32.xlu0 %v496
    %v498 = vpop.xlane.xlu0 %497
    %v499 = vsub.f32 %v491, %v495
    %v500 = vsub.f32 %v492, %v498
    %v501 = vmul.f32 %v499, 1.442695
    %v502 = vpow.pop %v501
    %v503 = vmul.f32 %v500, 1.442695
    %v504 = vpow.pop %v503
    %v505 = vsel %vm192, %v502, 0.0
    %506 = vadd.xlane.f32.xlu0 %v505
    %v507 = vpop.xlane.xlu0 %506
    %v508 = vsel %vm192, %v504, 0.0
    %509 = vadd.xlane.f32.xlu0 %v508
    %v510 = vpop.xlane.xlu0 %509
    %v511 = vrcp.pop %v507
    %v512 = vrcp.pop %v510
    %v513 = vmul.f32 %v502, %v511
    %v514 = vmul.f32 %v504, %v512
    %515 = vrot.lane.b32.xlu0 %v145, 40
    %v516 = vpop.permute.xlu0 %515
    %517 = vrot.lane.b32.xlu0 %v148, 40
    %v518 = vpop.permute.xlu0 %517
    %v522 = vsel %vm192, %v513, 0
    %v525 = vsel %vm192, %v514, 0
    %527 = vmatpush.msra.mxu0 0.0
    %528 = vmatpush.msra.mxu0 0.0
    %529 = vmatpush.msra.mxu0 0.0
    %530 = vmatpush.msra.mxu0 0.0
    %531 = vmatpush.msra.mxu0 0.0
    %532 = vmatpush.msra.mxu0 0.0
    %533 = vmatpush.msra.mxu0 0.0
    %534 = vmatpush.msra.mxu0 0.0
    %535 = vmatpush.msra.mxu0 0.0
    %536 = vmatpush.msra.mxu0 0.0
    %537 = vmatpush.msra.mxu0 0.0
    %538 = vmatpush.msra.mxu0 0.0
    %539 = vmatpush.msra.mxu0 0.0
    %540 = vmatpush.msra.mxu0 0.0
    %541 = vmatpush.msra.mxu0 %v518
    %542 = vmatpush.msra.mxu0 %v516
    %543 = vmatmul.f32.gmra.mxu0 %v522
    %v544 = vpop.f32.mrf.mxu0
    %v545 = vadd.f32 0.0, %v544
    %546 = vmatmul.f32.gmra.mxu0 %v525
    %v547 = vpop.f32.mrf.mxu0
    %v548 = vadd.f32 0.0, %v547
    %549 = vdwg.mxu0
    %552 = vrot.lane.b32.xlu0 %v345, 8
    %v553 = vpop.permute.xlu0 %552
    %554 = vrot.lane.b32.xlu0 %v348, 8
    %v555 = vpop.permute.xlu0 %554
    %560 = vrot.lane.b32.xlu0 %v445, 16
    %v561 = vpop.permute.xlu0 %560
    %562 = vrot.lane.b32.xlu0 %v448, 16
    %v563 = vpop.permute.xlu0 %562
    %568 = vrot.lane.b32.xlu0 %v545, 24
    %v569 = vpop.permute.xlu0 %568
    %570 = vrot.lane.b32.xlu0 %v548, 24
    %v571 = vpop.permute.xlu0 %570
    %v574 = vsel %vm156, %v245, %v553
    %v575 = vsel %vm156, %v248, %v555
    %v576 = vsel %vm192, %v574, %v561
    %v577 = vsel %vm192, %v575, %v563
    %vm578 = vcmask 195584
    %v579 = vsel %vm578, %v576, %v569
    %v580 = vsel %vm578, %v577, %v571
    %v581 = vperm.slane %v118, 2
    %v583 = vsel %vm120, %v579, 0
    %v586 = vsel %vm120, %v580, 0
    %588 = vmatpush.msra.mxu0 0.0
    %589 = vmatpush.msra.mxu0 0.0
    %590 = vmatpush.msra.mxu0 0.0
    %591 = vmatpush.msra.mxu0 0.0
    %592 = vmatpush.msra.mxu0 0.0
    %593 = vmatpush.msra.mxu0 0.0
    %594 = vmatpush.msra.mxu0 0.0
    %595 = vmatpush.msra.mxu0 0.0
    %596 = vmatpush.msra.mxu0 0.0
    %597 = vmatpush.msra.mxu0 0.0
    %598 = vmatpush.msra.mxu0 0.0
    %599 = vmatpush.msra.mxu0 0.0
    %600 = vmatpush.msra.mxu0 %v105
    %601 = vmatpush.msra.mxu0 %v104
    %602 = vmatpush.msra.mxu0 %v103
    %603 = vmatpush.msra.mxu0 %v102
    %604 = vmatmul.f32.gmra.mxu0 %v583
    %v605 = vpop.f32.mrf.mxu0
    %v606 = vadd.f32 %v581, %v605
    %607 = vmatmul.f32.gmra.mxu0 %v586
    %v608 = vpop.f32.mrf.mxu0
    %v609 = vadd.f32 %v581, %v608
    %610 = vdwg.mxu0
    %v611 = vadd.f32 %v606, %v87
    %v612 = vadd.f32 %v609, %v90
    %v613 = vsel %vm120, %v611, 0.0
    %614 = vadd.xlane.f32.xlu0 %v613
    %v615 = vpop.xlane.xlu0 %614
    %v616 = vsel %vm120, %v612, 0.0
    %617 = vadd.xlane.f32.xlu0 %v616
    %v618 = vpop.xlane.xlu0 %617
    %v619 = vrcp.pop 32.0
    %v620 = vmul.f32 32.0, %v619
    %v621 = vsub.f32 1.0, %v620
    %v622 = vmul.f32 %v619, %v621
    %v623 = vadd.f32 %v619, %v622
    %vm624 = vweird.f32 %v619
    %v625 = vsel %vm624, %v619, %v623
    %v626 = vmul.f32 %v615, %v625
    %v627 = vmul.f32 %v618, %v625
    %v628 = vsub.f32 %v611, %v626
    %v629 = vsub.f32 %v612, %v627
    %v630 = vmul.f32 %v628, %v628
    %v631 = vmul.f32 %v629, %v629
    %v632 = vsel %vm120, %v630, 0.0
    %633 = vadd.xlane.f32.xlu0 %v632
    %v634 = vpop.xlane.xlu0 %633
    %v635 = vsel %vm120, %v631, 0.0
    %636 = vadd.xlane.f32.xlu0 %v635
    %v637 = vpop.xlane.xlu0 %636
    %v638 = vmul.f32 %v634, %v625
    %v639 = vmul.f32 %v637, %v625
    %v640 = vrsqrt.pop %v638
    %v641 = vmul.f32 %v640, %v638
    %v642 = vmul.f32 %v641, %v640
    %v643 = vmul.f32 0.5, %v642
    %v644 = vsub.f32 1.5, %v643
    %v645 = vmul.f32 %v640, %v644
    %v646 = vmul.f32 %v638, %v645
    %vm647 = vcmp.eq.f32.partialorder %v638, inf
    %v648 = vsel %vm647, %v638, %v646
    %vm649 = vcmp.eq.f32.partialorder %v638, 0.0
    %v650 = vand.u32 %v638, 2147483648
    %v651 = vsel %vm649, %v650, %v648
    %v652 = vrsqrt.pop %v639
    %v653 = vmul.f32 %v652, %v639
    %v654 = vmul.f32 %v653, %v652
    %v655 = vmul.f32 0.5, %v654
    %v656 = vsub.f32 1.5, %v655
    %v657 = vmul.f32 %v652, %v656
    %v658 = vmul.f32 %v639, %v657
    %vm659 = vcmp.eq.f32.partialorder %v639, inf
    %v660 = vsel %vm659, %v639, %v658
    %vm661 = vcmp.eq.f32.partialorder %v639, 0.0
    %v662 = vand.u32 %v639, 2147483648
    %v663 = vsel %vm661, %v662, %v660
    %v664 = vadd.f32 %v651, 1e-06
    %v665 = vadd.f32 %v663, 1e-06
    %v666 = vrsqrt.pop %v664
    %v667 = vmul.f32 %v666, %v664
    %v668 = vmul.f32 %v667, %v666
    %v669 = vmul.f32 0.5, %v668
    %v670 = vsub.f32 1.5, %v669
    %v671 = vmul.f32 %v666, %v670
    %vm672 = vweird.f32 %v664
    %vm673 = vweird.f32 %v666
    %vm674 = vmor %vm672, %vm673
    %v675 = vsel %vm674, %v666, %v671
    %v676 = vrsqrt.pop %v665
    %v677 = vmul.f32 %v676, %v665
    %v678 = vmul.f32 %v677, %v676
    %v679 = vmul.f32 0.5, %v678
    %v680 = vsub.f32 1.5, %v679
    %v681 = vmul.f32 %v676, %v680
    %vm682 = vweird.f32 %v665
    %vm683 = vweird.f32 %v676
    %vm684 = vmor %vm682, %vm683
    %v685 = vsel %vm684, %v676, %v681
    %v686 = vmul.f32 %v628, %v675
    %v687 = vmul.f32 %v629, %v685
    %v688 = vperm.slane %v118, 3
    %v689 = vmul.f32 %v688, %v686
    %v690 = vmul.f32 %v688, %v687
    %v691 = vperm.slane %v118, 4
    %v692 = vadd.f32 %v689, %v691
    %v693 = vadd.f32 %v690, %v691
    %v694 = vperm.slane %v118, 1
    %v696 = vsel %vm120, %v692, 0
    %v699 = vsel %vm120, %v693, 0
    %701 = vmatpush.msra.mxu0 0.0
    %702 = vmatpush.msra.mxu0 0.0
    %703 = vmatpush.msra.mxu0 0.0
    %704 = vmatpush.msra.mxu0 0.0
    %705 = vmatpush.msra.mxu0 0.0
    %706 = vmatpush.msra.mxu0 0.0
    %707 = vmatpush.msra.mxu0 0.0
    %708 = vmatpush.msra.mxu0 0.0
    %709 = vmatpush.msra.mxu0 0.0
    %710 = vmatpush.msra.mxu0 0.0
    %711 = vmatpush.msra.mxu0 0.0
    %712 = vmatpush.msra.mxu0 0.0
    %713 = vmatpush.msra.mxu0 %v109
    %714 = vmatpush.msra.mxu0 %v108
    %715 = vmatpush.msra.mxu0 %v107
    %716 = vmatpush.msra.mxu0 %v106
    %717 = vmatmul.f32.gmra.mxu0 %v696
    %v718 = vpop.f32.mrf.mxu0
    %v719 = vadd.f32 %v694, %v718
    %720 = vmatmul.f32.gmra.mxu0 %v699
    %v721 = vpop.f32.mrf.mxu0
    %v722 = vadd.f32 %v694, %v721
    %723 = vdwg.mxu0
    %v724 = vmax.f32 %v719, 0.0
    %v725 = vmax.f32 %v722, 0.0
    %v726 = vperm.slane %v118, 5
    %vm727 = vcmask 523264
    %v729 = vsel %vm727, %v724, 0
    %v732 = vsel %vm727, %v725, 0
    %734 = vmatpush.msra.mxu0 0.0
    %735 = vmatpush.msra.mxu0 0.0
    %736 = vmatpush.msra.mxu0 0.0
    %737 = vmatpush.msra.mxu0 0.0
    %738 = vmatpush.msra.mxu0 0.0
    %739 = vmatpush.msra.mxu0 0.0
    %740 = vmatpush.msra.mxu0 0.0
    %741 = vmatpush.msra.mxu0 0.0
    %742 = vmatpush.msra.mxu0 %v117
    %743 = vmatpush.msra.mxu0 %v116
    %744 = vmatpush.msra.mxu0 %v115
    %745 = vmatpush.msra.mxu0 %v114
    %746 = vmatpush.msra.mxu0 %v113
    %747 = vmatpush.msra.mxu0 %v112
    %748 = vmatpush.msra.mxu0 %v111
    %749 = vmatpush.msra.mxu0 %v110
    %750 = vmatmul.f32.gmra.mxu0 %v729
    %v751 = vpop.f32.mrf.mxu0
    %v752 = vadd.f32 %v726, %v751
    %753 = vmatmul.f32.gmra.mxu0 %v732
    %v754 = vpop.f32.mrf.mxu0
    %v755 = vadd.f32 %v726, %v754
    %756 = vdwg.mxu0
    %v757 = vadd.f32 %v752, %v692
    %v758 = vadd.f32 %v755, %v693
    %v759 = vsel %vm120, %v757, 0.0
    %760 = vadd.xlane.f32.xlu0 %v759
    %v761 = vpop.xlane.xlu0 %760
    %v762 = vsel %vm120, %v758, 0.0
    %763 = vadd.xlane.f32.xlu0 %v762
    %v764 = vpop.xlane.xlu0 %763
    %v765 = vmul.f32 %v761, %v625
    %v766 = vmul.f32 %v764, %v625
    %v767 = vsub.f32 %v757, %v765
    %v768 = vsub.f32 %v758, %v766
    %v769 = vmul.f32 %v767, %v767
    %v770 = vmul.f32 %v768, %v768
    %v771 = vsel %vm120, %v769, 0.0
    %772 = vadd.xlane.f32.xlu0 %v771
    %v773 = vpop.xlane.xlu0 %772
    %v774 = vsel %vm120, %v770, 0.0
    %775 = vadd.xlane.f32.xlu0 %v774
    %v776 = vpop.xlane.xlu0 %775
    %v777 = vmul.f32 %v773, %v625
    %v778 = vmul.f32 %v776, %v625
    %v779 = vrsqrt.pop %v777
    %v780 = vmul.f32 %v779, %v777
    %v781 = vmul.f32 %v780, %v779
    %v782 = vmul.f32 0.5, %v781
    %v783 = vsub.f32 1.5, %v782
    %v784 = vmul.f32 %v779, %v783
    %v785 = vmul.f32 %v777, %v784
    %vm786 = vcmp.eq.f32.partialorder %v777, inf
    %v787 = vsel %vm786, %v777, %v785
    %vm788 = vcmp.eq.f32.partialorder %v777, 0.0
    %v789 = vand.u32 %v777, 2147483648
    %v790 = vsel %vm788, %v789, %v787
    %v791 = vrsqrt.pop %v778
    %v792 = vmul.f32 %v791, %v778
    %v793 = vmul.f32 %v792, %v791
    %v794 = vmul.f32 0.5, %v793
    %v795 = vsub.f32 1.5, %v794
    %v796 = vmul.f32 %v791, %v795
    %v797 = vmul.f32 %v778, %v796
    %vm798 = vcmp.eq.f32.partialorder %v778, inf
    %v799 = vsel %vm798, %v778, %v797
    %vm800 = vcmp.eq.f32.partialorder %v778, 0.0
    %v801 = vand.u32 %v778, 2147483648
    %v802 = vsel %vm800, %v801, %v799
    %v803 = vadd.f32 %v790, 1e-06
    %v804 = vadd.f32 %v802, 1e-06
    %v805 = vrsqrt.pop %v803
    %v806 = vmul.f32 %v805, %v803
    %v807 = vmul.f32 %v806, %v805
    %v808 = vmul.f32 0.5, %v807
    %v809 = vsub.f32 1.5, %v808
    %v810 = vmul.f32 %v805, %v809
    %vm811 = vweird.f32 %v803
    %vm812 = vweird.f32 %v805
    %vm813 = vmor %vm811, %vm812
    %v814 = vsel %vm813, %v805, %v810
    %v815 = vrsqrt.pop %v804
    %v816 = vmul.f32 %v815, %v804
    %v817 = vmul.f32 %v816, %v815
    %v818 = vmul.f32 0.5, %v817
    %v819 = vsub.f32 1.5, %v818
    %v820 = vmul.f32 %v815, %v819
    %vm821 = vweird.f32 %v804
    %vm822 = vweird.f32 %v815
    %vm823 = vmor %vm821, %vm822
    %v824 = vsel %vm823, %v815, %v820
    %v825 = vmul.f32 %v767, %v814
    %v826 = vmul.f32 %v768, %v824
    %v827 = vperm.slane %v118, 6
    %v828 = vmul.f32 %v827, %v825
    %v829 = vmul.f32 %v827, %v826
    %v830 = vperm.slane %v118, 7
    %v831 = vadd.f32 %v828, %v830
    %v832 = vadd.f32 %v829, %v830
    %s833 = scalar_lea.vmem %s4, 32
    %v834 = vld [vmem:[%s833] sm:$0xff]
    %v835 = vld [vmem:[%s833 + $0x8] sm:$0xff]
    %v836 = vld [vmem:[%s833 + $0x10] sm:$0xff]
    %v837 = vld [vmem:[%s833 + $0x18] sm:$0xff]
    %s838 = scalar_lea.vmem %s5, 32
    %v839 = vld [vmem:[%s838] sm:$0xff]
    %v840 = vld [vmem:[%s838 + $0x8] sm:$0xff]
    %v841 = vld [vmem:[%s838 + $0x10] sm:$0xff]
    %v842 = vld [vmem:[%s838 + $0x18] sm:$0xff]
    %s843 = scalar_lea.vmem %s6, 32
    %v844 = vld [vmem:[%s843] sm:$0xff]
    %v845 = vld [vmem:[%s843 + $0x8] sm:$0xff]
    %v846 = vld [vmem:[%s843 + $0x10] sm:$0xff]
    %v847 = vld [vmem:[%s843 + $0x18] sm:$0xff]
    %s848 = scalar_lea.vmem %s7, 64
    %v849 = vld [vmem:[%s848] sm:$0xff]
    %v850 = vld [vmem:[%s848 + $0x8] sm:$0xff]
    %v851 = vld [vmem:[%s848 + $0x10] sm:$0xff]
    %v852 = vld [vmem:[%s848 + $0x18] sm:$0xff]
    %v853 = vld [vmem:[%s848 + $0x20] sm:$0xff]
    %v854 = vld [vmem:[%s848 + $0x28] sm:$0xff]
    %v855 = vld [vmem:[%s848 + $0x30] sm:$0xff]
    %v856 = vld [vmem:[%s848 + $0x38] sm:$0xff]
    %s857 = scalar_lea.vmem %s8, 8
    %v858 = vld [vmem:[%s857] sm:$0xff]
    %v859 = vperm.slane %v858, 0
    %v861 = vsel %vm120, %v831, 0
    %v864 = vsel %vm120, %v832, 0
    %866 = vmatpush.msra.mxu0 0.0
    %867 = vmatpush.msra.mxu0 0.0
    %868 = vmatpush.msra.mxu0 0.0
    %869 = vmatpush.msra.mxu0 0.0
    %870 = vmatpush.msra.mxu0 0.0
    %871 = vmatpush.msra.mxu0 0.0
    %872 = vmatpush.msra.mxu0 0.0
    %873 = vmatpush.msra.mxu0 0.0
    %874 = vmatpush.msra.mxu0 0.0
    %875 = vmatpush.msra.mxu0 0.0
    %876 = vmatpush.msra.mxu0 0.0
    %877 = vmatpush.msra.mxu0 0.0
    %878 = vmatpush.msra.mxu0 %v837
    %879 = vmatpush.msra.mxu0 %v836
    %880 = vmatpush.msra.mxu0 %v835
    %881 = vmatpush.msra.mxu0 %v834
    %882 = vmatmul.f32.gmra.mxu0 %v861
    %v883 = vpop.f32.mrf.mxu0
    %v884 = vadd.f32 %v859, %v883
    %885 = vmatmul.f32.gmra.mxu0 %v864
    %v886 = vpop.f32.mrf.mxu0
    %v887 = vadd.f32 %v859, %v886
    %888 = vdwg.mxu0
    %891 = vrot.lane.b32.xlu0 %v884, 96
    %v892 = vpop.permute.xlu0 %891
    %893 = vrot.lane.b32.xlu0 %v887, 96
    %v894 = vpop.permute.xlu0 %893
    %v895 = vsel %vm156, %v884, 0
    %v897 = vsel %vm156, %v887, 0
    %v899 = vsel %vm156, %v892, 0
    %v901 = vsel %vm156, %v894, 0
    %903 = vmatpush.xpose.msra.mxu0 0.0
    %904 = vmatpush.xpose.msra.mxu0 0.0
    %905 = vmatpush.xpose.msra.mxu0 0.0
    %906 = vmatpush.xpose.msra.mxu0 0.0
    %907 = vmatpush.xpose.msra.mxu0 0.0
    %908 = vmatpush.xpose.msra.mxu0 0.0
    %909 = vmatpush.xpose.msra.mxu0 0.0
    %910 = vmatpush.xpose.msra.mxu0 0.0
    %911 = vmatpush.xpose.msra.mxu0 0.0
    %912 = vmatpush.xpose.msra.mxu0 0.0
    %913 = vmatpush.xpose.msra.mxu0 0.0
    %914 = vmatpush.xpose.msra.mxu0 0.0
    %915 = vmatpush.xpose.msra.mxu0 0.0
    %916 = vmatpush.xpose.msra.mxu0 0.0
    %917 = vmatpush.xpose.msra.mxu0 %v901
    %918 = vmatpush.xpose.msra.mxu0 %v899
    %919 = vmatmul.f32.gmra.mxu0 %v895
    %v920 = vpop.f32.mrf.mxu0
    %v921 = vadd.f32 0.0, %v920
    %922 = vmatmul.f32.gmra.mxu0 %v897
    %v923 = vpop.f32.mrf.mxu0
    %v924 = vadd.f32 0.0, %v923
    %925 = vdwg.mxu0
    %v926 = vmul.f32 %v921, 0.35355338
    %v927 = vmul.f32 %v924, 0.35355338
    %v928 = vadd.f32 %v926, %v96
    %v929 = vadd.f32 %v927, %v97
    %v930 = vsel %vm192, %v928, -inf
    %931 = vmax.xlane.f32.xlu0 %v930
    %v932 = vpop.xlane.xlu0 %931
    %v933 = vsel %vm192, %v929, -inf
    %934 = vmax.xlane.f32.xlu0 %v933
    %v935 = vpop.xlane.xlu0 %934
    %v936 = vsub.f32 %v928, %v932
    %v937 = vsub.f32 %v929, %v935
    %v938 = vmul.f32 %v936, 1.442695
    %v939 = vpow.pop %v938
    %v940 = vmul.f32 %v937, 1.442695
    %v941 = vpow.pop %v940
    %v942 = vsel %vm192, %v939, 0.0
    %943 = vadd.xlane.f32.xlu0 %v942
    %v944 = vpop.xlane.xlu0 %943
    %v945 = vsel %vm192, %v941, 0.0
    %946 = vadd.xlane.f32.xlu0 %v945
    %v947 = vpop.xlane.xlu0 %946
    %v948 = vrcp.pop %v944
    %v949 = vrcp.pop %v947
    %v950 = vmul.f32 %v939, %v948
    %v951 = vmul.f32 %v941, %v949
    %952 = vrot.lane.b32.xlu0 %v884, 64
    %v953 = vpop.permute.xlu0 %952
    %954 = vrot.lane.b32.xlu0 %v887, 64
    %v955 = vpop.permute.xlu0 %954
    %v959 = vsel %vm192, %v950, 0
    %v962 = vsel %vm192, %v951, 0
    %964 = vmatpush.msra.mxu0 0.0
    %965 = vmatpush.msra.mxu0 0.0
    %966 = vmatpush.msra.mxu0 0.0
    %967 = vmatpush.msra.mxu0 0.0
    %968 = vmatpush.msra.mxu0 0.0
    %969 = vmatpush.msra.mxu0 0.0
    %970 = vmatpush.msra.mxu0 0.0
    %971 = vmatpush.msra.mxu0 0.0
    %972 = vmatpush.msra.mxu0 0.0
    %973 = vmatpush.msra.mxu0 0.0
    %974 = vmatpush.msra.mxu0 0.0
    %975 = vmatpush.msra.mxu0 0.0
    %976 = vmatpush.msra.mxu0 0.0
    %977 = vmatpush.msra.mxu0 0.0
    %978 = vmatpush.msra.mxu0 %v955
    %979 = vmatpush.msra.mxu0 %v953
    %980 = vmatmul.f32.gmra.mxu0 %v959
    %v981 = vpop.f32.mrf.mxu0
    %v982 = vadd.f32 0.0, %v981
    %983 = vmatmul.f32.gmra.mxu0 %v962
    %v984 = vpop.f32.mrf.mxu0
    %v985 = vadd.f32 0.0, %v984
    %986 = vdwg.mxu0
    %987 = vrot.lane.b32.xlu0 %v884, 120
    %v988 = vpop.permute.xlu0 %987
    %989 = vrot.lane.b32.xlu0 %v887, 120
    %v990 = vpop.permute.xlu0 %989
    %991 = vrot.lane.b32.xlu0 %v884, 88
    %v992 = vpop.permute.xlu0 %991
    %993 = vrot.lane.b32.xlu0 %v887, 88
    %v994 = vpop.permute.xlu0 %993
    %v995 = vsel %vm156, %v988, 0
    %v997 = vsel %vm156, %v990, 0
    %v999 = vsel %vm156, %v992, 0
    %v1001 = vsel %vm156, %v994, 0
    %1003 = vmatpush.xpose.msra.mxu0 0.0
    %1004 = vmatpush.xpose.msra.mxu0 0.0
    %1005 = vmatpush.xpose.msra.mxu0 0.0
    %1006 = vmatpush.xpose.msra.mxu0 0.0
    %1007 = vmatpush.xpose.msra.mxu0 0.0
    %1008 = vmatpush.xpose.msra.mxu0 0.0
    %1009 = vmatpush.xpose.msra.mxu0 0.0
    %1010 = vmatpush.xpose.msra.mxu0 0.0
    %1011 = vmatpush.xpose.msra.mxu0 0.0
    %1012 = vmatpush.xpose.msra.mxu0 0.0
    %1013 = vmatpush.xpose.msra.mxu0 0.0
    %1014 = vmatpush.xpose.msra.mxu0 0.0
    %1015 = vmatpush.xpose.msra.mxu0 0.0
    %1016 = vmatpush.xpose.msra.mxu0 0.0
    %1017 = vmatpush.xpose.msra.mxu0 %v1001
    %1018 = vmatpush.xpose.msra.mxu0 %v999
    %1019 = vmatmul.f32.gmra.mxu0 %v995
    %v1020 = vpop.f32.mrf.mxu0
    %v1021 = vadd.f32 0.0, %v1020
    %1022 = vmatmul.f32.gmra.mxu0 %v997
    %v1023 = vpop.f32.mrf.mxu0
    %v1024 = vadd.f32 0.0, %v1023
    %1025 = vdwg.mxu0
    %v1026 = vmul.f32 %v1021, 0.35355338
    %v1027 = vmul.f32 %v1024, 0.35355338
    %v1028 = vadd.f32 %v1026, %v96
    %v1029 = vadd.f32 %v1027, %v97
    %v1030 = vsel %vm192, %v1028, -inf
    %1031 = vmax.xlane.f32.xlu0 %v1030
    %v1032 = vpop.xlane.xlu0 %1031
    %v1033 = vsel %vm192, %v1029, -inf
    %1034 = vmax.xlane.f32.xlu0 %v1033
    %v1035 = vpop.xlane.xlu0 %1034
    %v1036 = vsub.f32 %v1028, %v1032
    %v1037 = vsub.f32 %v1029, %v1035
    %v1038 = vmul.f32 %v1036, 1.442695
    %v1039 = vpow.pop %v1038
    %v1040 = vmul.f32 %v1037, 1.442695
    %v1041 = vpow.pop %v1040
    %v1042 = vsel %vm192, %v1039, 0.0
    %1043 = vadd.xlane.f32.xlu0 %v1042
    %v1044 = vpop.xlane.xlu0 %1043
    %v1045 = vsel %vm192, %v1041, 0.0
    %1046 = vadd.xlane.f32.xlu0 %v1045
    %v1047 = vpop.xlane.xlu0 %1046
    %v1048 = vrcp.pop %v1044
    %v1049 = vrcp.pop %v1047
    %v1050 = vmul.f32 %v1039, %v1048
    %v1051 = vmul.f32 %v1041, %v1049
    %1052 = vrot.lane.b32.xlu0 %v884, 56
    %v1053 = vpop.permute.xlu0 %1052
    %1054 = vrot.lane.b32.xlu0 %v887, 56
    %v1055 = vpop.permute.xlu0 %1054
    %v1059 = vsel %vm192, %v1050, 0
    %v1062 = vsel %vm192, %v1051, 0
    %1064 = vmatpush.msra.mxu0 0.0
    %1065 = vmatpush.msra.mxu0 0.0
    %1066 = vmatpush.msra.mxu0 0.0
    %1067 = vmatpush.msra.mxu0 0.0
    %1068 = vmatpush.msra.mxu0 0.0
    %1069 = vmatpush.msra.mxu0 0.0
    %1070 = vmatpush.msra.mxu0 0.0
    %1071 = vmatpush.msra.mxu0 0.0
    %1072 = vmatpush.msra.mxu0 0.0
    %1073 = vmatpush.msra.mxu0 0.0
    %1074 = vmatpush.msra.mxu0 0.0
    %1075 = vmatpush.msra.mxu0 0.0
    %1076 = vmatpush.msra.mxu0 0.0
    %1077 = vmatpush.msra.mxu0 0.0
    %1078 = vmatpush.msra.mxu0 %v1055
    %1079 = vmatpush.msra.mxu0 %v1053
    %1080 = vmatmul.f32.gmra.mxu0 %v1059
    %v1081 = vpop.f32.mrf.mxu0
    %v1082 = vadd.f32 0.0, %v1081
    %1083 = vmatmul.f32.gmra.mxu0 %v1062
    %v1084 = vpop.f32.mrf.mxu0
    %v1085 = vadd.f32 0.0, %v1084
    %1086 = vdwg.mxu0
    %1087 = vrot.lane.b32.xlu0 %v884, 112
    %v1088 = vpop.permute.xlu0 %1087
    %1089 = vrot.lane.b32.xlu0 %v887, 112
    %v1090 = vpop.permute.xlu0 %1089
    %1091 = vrot.lane.b32.xlu0 %v884, 80
    %v1092 = vpop.permute.xlu0 %1091
    %1093 = vrot.lane.b32.xlu0 %v887, 80
    %v1094 = vpop.permute.xlu0 %1093
    %v1095 = vsel %vm156, %v1088, 0
    %v1097 = vsel %vm156, %v1090, 0
    %v1099 = vsel %vm156, %v1092, 0
    %v1101 = vsel %vm156, %v1094, 0
    %1103 = vmatpush.xpose.msra.mxu0 0.0
    %1104 = vmatpush.xpose.msra.mxu0 0.0
    %1105 = vmatpush.xpose.msra.mxu0 0.0
    %1106 = vmatpush.xpose.msra.mxu0 0.0
    %1107 = vmatpush.xpose.msra.mxu0 0.0
    %1108 = vmatpush.xpose.msra.mxu0 0.0
    %1109 = vmatpush.xpose.msra.mxu0 0.0
    %1110 = vmatpush.xpose.msra.mxu0 0.0
    %1111 = vmatpush.xpose.msra.mxu0 0.0
    %1112 = vmatpush.xpose.msra.mxu0 0.0
    %1113 = vmatpush.xpose.msra.mxu0 0.0
    %1114 = vmatpush.xpose.msra.mxu0 0.0
    %1115 = vmatpush.xpose.msra.mxu0 0.0
    %1116 = vmatpush.xpose.msra.mxu0 0.0
    %1117 = vmatpush.xpose.msra.mxu0 %v1101
    %1118 = vmatpush.xpose.msra.mxu0 %v1099
    %1119 = vmatmul.f32.gmra.mxu0 %v1095
    %v1120 = vpop.f32.mrf.mxu0
    %v1121 = vadd.f32 0.0, %v1120
    %1122 = vmatmul.f32.gmra.mxu0 %v1097
    %v1123 = vpop.f32.mrf.mxu0
    %v1124 = vadd.f32 0.0, %v1123
    %1125 = vdwg.mxu0
    %v1126 = vmul.f32 %v1121, 0.35355338
    %v1127 = vmul.f32 %v1124, 0.35355338
    %v1128 = vadd.f32 %v1126, %v96
    %v1129 = vadd.f32 %v1127, %v97
    %v1130 = vsel %vm192, %v1128, -inf
    %1131 = vmax.xlane.f32.xlu0 %v1130
    %v1132 = vpop.xlane.xlu0 %1131
    %v1133 = vsel %vm192, %v1129, -inf
    %1134 = vmax.xlane.f32.xlu0 %v1133
    %v1135 = vpop.xlane.xlu0 %1134
    %v1136 = vsub.f32 %v1128, %v1132
    %v1137 = vsub.f32 %v1129, %v1135
    %v1138 = vmul.f32 %v1136, 1.442695
    %v1139 = vpow.pop %v1138
    %v1140 = vmul.f32 %v1137, 1.442695
    %v1141 = vpow.pop %v1140
    %v1142 = vsel %vm192, %v1139, 0.0
    %1143 = vadd.xlane.f32.xlu0 %v1142
    %v1144 = vpop.xlane.xlu0 %1143
    %v1145 = vsel %vm192, %v1141, 0.0
    %1146 = vadd.xlane.f32.xlu0 %v1145
    %v1147 = vpop.xlane.xlu0 %1146
    %v1148 = vrcp.pop %v1144
    %v1149 = vrcp.pop %v1147
    %v1150 = vmul.f32 %v1139, %v1148
    %v1151 = vmul.f32 %v1141, %v1149
    %1152 = vrot.lane.b32.xlu0 %v884, 48
    %v1153 = vpop.permute.xlu0 %1152
    %1154 = vrot.lane.b32.xlu0 %v887, 48
    %v1155 = vpop.permute.xlu0 %1154
    %v1159 = vsel %vm192, %v1150, 0
    %v1162 = vsel %vm192, %v1151, 0
    %1164 = vmatpush.msra.mxu0 0.0
    %1165 = vmatpush.msra.mxu0 0.0
    %1166 = vmatpush.msra.mxu0 0.0
    %1167 = vmatpush.msra.mxu0 0.0
    %1168 = vmatpush.msra.mxu0 0.0
    %1169 = vmatpush.msra.mxu0 0.0
    %1170 = vmatpush.msra.mxu0 0.0
    %1171 = vmatpush.msra.mxu0 0.0
    %1172 = vmatpush.msra.mxu0 0.0
    %1173 = vmatpush.msra.mxu0 0.0
    %1174 = vmatpush.msra.mxu0 0.0
    %1175 = vmatpush.msra.mxu0 0.0
    %1176 = vmatpush.msra.mxu0 0.0
    %1177 = vmatpush.msra.mxu0 0.0
    %1178 = vmatpush.msra.mxu0 %v1155
    %1179 = vmatpush.msra.mxu0 %v1153
    %1180 = vmatmul.f32.gmra.mxu0 %v1159
    %v1181 = vpop.f32.mrf.mxu0
    %v1182 = vadd.f32 0.0, %v1181
    %1183 = vmatmul.f32.gmra.mxu0 %v1162
    %v1184 = vpop.f32.mrf.mxu0
    %v1185 = vadd.f32 0.0, %v1184
    %1186 = vdwg.mxu0
    %1187 = vrot.lane.b32.xlu0 %v884, 104
    %v1188 = vpop.permute.xlu0 %1187
    %1189 = vrot.lane.b32.xlu0 %v887, 104
    %v1190 = vpop.permute.xlu0 %1189
    %1191 = vrot.lane.b32.xlu0 %v884, 72
    %v1192 = vpop.permute.xlu0 %1191
    %1193 = vrot.lane.b32.xlu0 %v887, 72
    %v1194 = vpop.permute.xlu0 %1193
    %v1195 = vsel %vm156, %v1188, 0
    %v1197 = vsel %vm156, %v1190, 0
    %v1199 = vsel %vm156, %v1192, 0
    %v1201 = vsel %vm156, %v1194, 0
    %1203 = vmatpush.xpose.msra.mxu0 0.0
    %1204 = vmatpush.xpose.msra.mxu0 0.0
    %1205 = vmatpush.xpose.msra.mxu0 0.0
    %1206 = vmatpush.xpose.msra.mxu0 0.0
    %1207 = vmatpush.xpose.msra.mxu0 0.0
    %1208 = vmatpush.xpose.msra.mxu0 0.0
    %1209 = vmatpush.xpose.msra.mxu0 0.0
    %1210 = vmatpush.xpose.msra.mxu0 0.0
    %1211 = vmatpush.xpose.msra.mxu0 0.0
    %1212 = vmatpush.xpose.msra.mxu0 0.0
    %1213 = vmatpush.xpose.msra.mxu0 0.0
    %1214 = vmatpush.xpose.msra.mxu0 0.0
    %1215 = vmatpush.xpose.msra.mxu0 0.0
    %1216 = vmatpush.xpose.msra.mxu0 0.0
    %1217 = vmatpush.xpose.msra.mxu0 %v1201
    %1218 = vmatpush.xpose.msra.mxu0 %v1199
    %1219 = vmatmul.f32.gmra.mxu0 %v1195
    %v1220 = vpop.f32.mrf.mxu0
    %v1221 = vadd.f32 0.0, %v1220
    %1222 = vmatmul.f32.gmra.mxu0 %v1197
    %v1223 = vpop.f32.mrf.mxu0
    %v1224 = vadd.f32 0.0, %v1223
    %1225 = vdwg.mxu0
    %v1226 = vmul.f32 %v1221, 0.35355338
    %v1227 = vmul.f32 %v1224, 0.35355338
    %v1228 = vadd.f32 %v1226, %v96
    %v1229 = vadd.f32 %v1227, %v97
    %v1230 = vsel %vm192, %v1228, -inf
    %1231 = vmax.xlane.f32.xlu0 %v1230
    %v1232 = vpop.xlane.xlu0 %1231
    %v1233 = vsel %vm192, %v1229, -inf
    %1234 = vmax.xlane.f32.xlu0 %v1233
    %v1235 = vpop.xlane.xlu0 %1234
    %v1236 = vsub.f32 %v1228, %v1232
    %v1237 = vsub.f32 %v1229, %v1235
    %v1238 = vmul.f32 %v1236, 1.442695
    %v1239 = vpow.pop %v1238
    %v1240 = vmul.f32 %v1237, 1.442695
    %v1241 = vpow.pop %v1240
    %v1242 = vsel %vm192, %v1239, 0.0
    %1243 = vadd.xlane.f32.xlu0 %v1242
    %v1244 = vpop.xlane.xlu0 %1243
    %v1245 = vsel %vm192, %v1241, 0.0
    %1246 = vadd.xlane.f32.xlu0 %v1245
    %v1247 = vpop.xlane.xlu0 %1246
    %v1248 = vrcp.pop %v1244
    %v1249 = vrcp.pop %v1247
    %v1250 = vmul.f32 %v1239, %v1248
    %v1251 = vmul.f32 %v1241, %v1249
    %1252 = vrot.lane.b32.xlu0 %v884, 40
    %v1253 = vpop.permute.xlu0 %1252
    %1254 = vrot.lane.b32.xlu0 %v887, 40
    %v1255 = vpop.permute.xlu0 %1254
    %v1259 = vsel %vm192, %v1250, 0
    %v1262 = vsel %vm192, %v1251, 0
    %1264 = vmatpush.msra.mxu0 0.0
    %1265 = vmatpush.msra.mxu0 0.0
    %1266 = vmatpush.msra.mxu0 0.0
    %1267 = vmatpush.msra.mxu0 0.0
    %1268 = vmatpush.msra.mxu0 0.0
    %1269 = vmatpush.msra.mxu0 0.0
    %1270 = vmatpush.msra.mxu0 0.0
    %1271 = vmatpush.msra.mxu0 0.0
    %1272 = vmatpush.msra.mxu0 0.0
    %1273 = vmatpush.msra.mxu0 0.0
    %1274 = vmatpush.msra.mxu0 0.0
    %1275 = vmatpush.msra.mxu0 0.0
    %1276 = vmatpush.msra.mxu0 0.0
    %1277 = vmatpush.msra.mxu0 0.0
    %1278 = vmatpush.msra.mxu0 %v1255
    %1279 = vmatpush.msra.mxu0 %v1253
    %1280 = vmatmul.f32.gmra.mxu0 %v1259
    %v1281 = vpop.f32.mrf.mxu0
    %v1282 = vadd.f32 0.0, %v1281
    %1283 = vmatmul.f32.gmra.mxu0 %v1262
    %v1284 = vpop.f32.mrf.mxu0
    %v1285 = vadd.f32 0.0, %v1284
    %1286 = vdwg.mxu0
    %1289 = vrot.lane.b32.xlu0 %v1082, 8
    %v1290 = vpop.permute.xlu0 %1289
    %1291 = vrot.lane.b32.xlu0 %v1085, 8
    %v1292 = vpop.permute.xlu0 %1291
    %1297 = vrot.lane.b32.xlu0 %v1182, 16
    %v1298 = vpop.permute.xlu0 %1297
    %1299 = vrot.lane.b32.xlu0 %v1185, 16
    %v1300 = vpop.permute.xlu0 %1299
    %1305 = vrot.lane.b32.xlu0 %v1282, 24
    %v1306 = vpop.permute.xlu0 %1305
    %1307 = vrot.lane.b32.xlu0 %v1285, 24
    %v1308 = vpop.permute.xlu0 %1307
    %v1311 = vsel %vm156, %v982, %v1290
    %v1312 = vsel %vm156, %v985, %v1292
    %v1313 = vsel %vm192, %v1311, %v1298
    %v1314 = vsel %vm192, %v1312, %v1300
    %v1315 = vsel %vm578, %v1313, %v1306
    %v1316 = vsel %vm578, %v1314, %v1308
    %v1317 = vperm.slane %v858, 2
    %v1319 = vsel %vm120, %v1315, 0
    %v1322 = vsel %vm120, %v1316, 0
    %1324 = vmatpush.msra.mxu0 0.0
    %1325 = vmatpush.msra.mxu0 0.0
    %1326 = vmatpush.msra.mxu0 0.0
    %1327 = vmatpush.msra.mxu0 0.0
    %1328 = vmatpush.msra.mxu0 0.0
    %1329 = vmatpush.msra.mxu0 0.0
    %1330 = vmatpush.msra.mxu0 0.0
    %1331 = vmatpush.msra.mxu0 0.0
    %1332 = vmatpush.msra.mxu0 0.0
    %1333 = vmatpush.msra.mxu0 0.0
    %1334 = vmatpush.msra.mxu0 0.0
    %1335 = vmatpush.msra.mxu0 0.0
    %1336 = vmatpush.msra.mxu0 %v842
    %1337 = vmatpush.msra.mxu0 %v841
    %1338 = vmatpush.msra.mxu0 %v840
    %1339 = vmatpush.msra.mxu0 %v839
    %1340 = vmatmul.f32.gmra.mxu0 %v1319
    %v1341 = vpop.f32.mrf.mxu0
    %v1342 = vadd.f32 %v1317, %v1341
    %1343 = vmatmul.f32.gmra.mxu0 %v1322
    %v1344 = vpop.f32.mrf.mxu0
    %v1345 = vadd.f32 %v1317, %v1344
    %1346 = vdwg.mxu0
    %v1347 = vadd.f32 %v1342, %v831
    %v1348 = vadd.f32 %v1345, %v832
    %v1349 = vsel %vm120, %v1347, 0.0
    %1350 = vadd.xlane.f32.xlu0 %v1349
    %v1351 = vpop.xlane.xlu0 %1350
    %v1352 = vsel %vm120, %v1348, 0.0
    %1353 = vadd.xlane.f32.xlu0 %v1352
    %v1354 = vpop.xlane.xlu0 %1353
    %v1355 = vmul.f32 %v1351, %v625
    %v1356 = vmul.f32 %v1354, %v625
    %v1357 = vsub.f32 %v1347, %v1355
    %v1358 = vsub.f32 %v1348, %v1356
    %v1359 = vmul.f32 %v1357, %v1357
    %v1360 = vmul.f32 %v1358, %v1358
    %v1361 = vsel %vm120, %v1359, 0.0
    %1362 = vadd.xlane.f32.xlu0 %v1361
    %v1363 = vpop.xlane.xlu0 %1362
    %v1364 = vsel %vm120, %v1360, 0.0
    %1365 = vadd.xlane.f32.xlu0 %v1364
    %v1366 = vpop.xlane.xlu0 %1365
    %v1367 = vmul.f32 %v1363, %v625
    %v1368 = vmul.f32 %v1366, %v625
    %v1369 = vrsqrt.pop %v1367
    %v1370 = vmul.f32 %v1369, %v1367
    %v1371 = vmul.f32 %v1370, %v1369
    %v1372 = vmul.f32 0.5, %v1371
    %v1373 = vsub.f32 1.5, %v1372
    %v1374 = vmul.f32 %v1369, %v1373
    %v1375 = vmul.f32 %v1367, %v1374
    %vm1376 = vcmp.eq.f32.partialorder %v1367, inf
    %v1377 = vsel %vm1376, %v1367, %v1375
    %vm1378 = vcmp.eq.f32.partialorder %v1367, 0.0
    %v1379 = vand.u32 %v1367, 2147483648
    %v1380 = vsel %vm1378, %v1379, %v1377
    %v1381 = vrsqrt.pop %v1368
    %v1382 = vmul.f32 %v1381, %v1368
    %v1383 = vmul.f32 %v1382, %v1381
    %v1384 = vmul.f32 0.5, %v1383
    %v1385 = vsub.f32 1.5, %v1384
    %v1386 = vmul.f32 %v1381, %v1385
    %v1387 = vmul.f32 %v1368, %v1386
    %vm1388 = vcmp.eq.f32.partialorder %v1368, inf
    %v1389 = vsel %vm1388, %v1368, %v1387
    %vm1390 = vcmp.eq.f32.partialorder %v1368, 0.0
    %v1391 = vand.u32 %v1368, 2147483648
    %v1392 = vsel %vm1390, %v1391, %v1389
    %v1393 = vadd.f32 %v1380, 1e-06
    %v1394 = vadd.f32 %v1392, 1e-06
    %v1395 = vrsqrt.pop %v1393
    %v1396 = vmul.f32 %v1395, %v1393
    %v1397 = vmul.f32 %v1396, %v1395
    %v1398 = vmul.f32 0.5, %v1397
    %v1399 = vsub.f32 1.5, %v1398
    %v1400 = vmul.f32 %v1395, %v1399
    %vm1401 = vweird.f32 %v1393
    %vm1402 = vweird.f32 %v1395
    %vm1403 = vmor %vm1401, %vm1402
    %v1404 = vsel %vm1403, %v1395, %v1400
    %v1405 = vrsqrt.pop %v1394
    %v1406 = vmul.f32 %v1405, %v1394
    %v1407 = vmul.f32 %v1406, %v1405
    %v1408 = vmul.f32 0.5, %v1407
    %v1409 = vsub.f32 1.5, %v1408
    %v1410 = vmul.f32 %v1405, %v1409
    %vm1411 = vweird.f32 %v1394
    %vm1412 = vweird.f32 %v1405
    %vm1413 = vmor %vm1411, %vm1412
    %v1414 = vsel %vm1413, %v1405, %v1410
    %v1415 = vmul.f32 %v1357, %v1404
    %v1416 = vmul.f32 %v1358, %v1414
    %v1417 = vperm.slane %v858, 3
    %v1418 = vmul.f32 %v1417, %v1415
    %v1419 = vmul.f32 %v1417, %v1416
    %v1420 = vperm.slane %v858, 4
    %v1421 = vadd.f32 %v1418, %v1420
    %v1422 = vadd.f32 %v1419, %v1420
    %v1423 = vperm.slane %v858, 1
    %v1425 = vsel %vm120, %v1421, 0
    %v1428 = vsel %vm120, %v1422, 0
    %1430 = vmatpush.msra.mxu0 0.0
    %1431 = vmatpush.msra.mxu0 0.0
    %1432 = vmatpush.msra.mxu0 0.0
    %1433 = vmatpush.msra.mxu0 0.0
    %1434 = vmatpush.msra.mxu0 0.0
    %1435 = vmatpush.msra.mxu0 0.0
    %1436 = vmatpush.msra.mxu0 0.0
    %1437 = vmatpush.msra.mxu0 0.0
    %1438 = vmatpush.msra.mxu0 0.0
    %1439 = vmatpush.msra.mxu0 0.0
    %1440 = vmatpush.msra.mxu0 0.0
    %1441 = vmatpush.msra.mxu0 0.0
    %1442 = vmatpush.msra.mxu0 %v847
    %1443 = vmatpush.msra.mxu0 %v846
    %1444 = vmatpush.msra.mxu0 %v845
    %1445 = vmatpush.msra.mxu0 %v844
    %1446 = vmatmul.f32.gmra.mxu0 %v1425
    %v1447 = vpop.f32.mrf.mxu0
    %v1448 = vadd.f32 %v1423, %v1447
    %1449 = vmatmul.f32.gmra.mxu0 %v1428
    %v1450 = vpop.f32.mrf.mxu0
    %v1451 = vadd.f32 %v1423, %v1450
    %1452 = vdwg.mxu0
    %v1453 = vmax.f32 %v1448, 0.0
    %v1454 = vmax.f32 %v1451, 0.0
    %v1455 = vperm.slane %v858, 5
    %v1457 = vsel %vm727, %v1453, 0
    %v1460 = vsel %vm727, %v1454, 0
    %1462 = vmatpush.msra.mxu0 0.0
    %1463 = vmatpush.msra.mxu0 0.0
    %1464 = vmatpush.msra.mxu0 0.0
    %1465 = vmatpush.msra.mxu0 0.0
    %1466 = vmatpush.msra.mxu0 0.0
    %1467 = vmatpush.msra.mxu0 0.0
    %1468 = vmatpush.msra.mxu0 0.0
    %1469 = vmatpush.msra.mxu0 0.0
    %1470 = vmatpush.msra.mxu0 %v856
    %1471 = vmatpush.msra.mxu0 %v855
    %1472 = vmatpush.msra.mxu0 %v854
    %1473 = vmatpush.msra.mxu0 %v853
    %1474 = vmatpush.msra.mxu0 %v852
    %1475 = vmatpush.msra.mxu0 %v851
    %1476 = vmatpush.msra.mxu0 %v850
    %1477 = vmatpush.msra.mxu0 %v849
    %1478 = vmatmul.f32.gmra.mxu0 %v1457
    %v1479 = vpop.f32.mrf.mxu0
    %v1480 = vadd.f32 %v1455, %v1479
    %1481 = vmatmul.f32.gmra.mxu0 %v1460
    %v1482 = vpop.f32.mrf.mxu0
    %v1483 = vadd.f32 %v1455, %v1482
    %1484 = vdwg.mxu0
    %v1485 = vadd.f32 %v1480, %v1421
    %v1486 = vadd.f32 %v1483, %v1422
    %v1487 = vsel %vm120, %v1485, 0.0
    %1488 = vadd.xlane.f32.xlu0 %v1487
    %v1489 = vpop.xlane.xlu0 %1488
    %v1490 = vsel %vm120, %v1486, 0.0
    %1491 = vadd.xlane.f32.xlu0 %v1490
    %v1492 = vpop.xlane.xlu0 %1491
    %v1493 = vmul.f32 %v1489, %v625
    %v1494 = vmul.f32 %v1492, %v625
    %v1495 = vsub.f32 %v1485, %v1493
    %v1496 = vsub.f32 %v1486, %v1494
    %v1497 = vmul.f32 %v1495, %v1495
    %v1498 = vmul.f32 %v1496, %v1496
    %v1499 = vsel %vm120, %v1497, 0.0
    %1500 = vadd.xlane.f32.xlu0 %v1499
    %v1501 = vpop.xlane.xlu0 %1500
    %v1502 = vsel %vm120, %v1498, 0.0
    %1503 = vadd.xlane.f32.xlu0 %v1502
    %v1504 = vpop.xlane.xlu0 %1503
    %v1505 = vmul.f32 %v1501, %v625
    %v1506 = vmul.f32 %v1504, %v625
    %v1507 = vrsqrt.pop %v1505
    %v1508 = vmul.f32 %v1507, %v1505
    %v1509 = vmul.f32 %v1508, %v1507
    %v1510 = vmul.f32 0.5, %v1509
    %v1511 = vsub.f32 1.5, %v1510
    %v1512 = vmul.f32 %v1507, %v1511
    %v1513 = vmul.f32 %v1505, %v1512
    %vm1514 = vcmp.eq.f32.partialorder %v1505, inf
    %v1515 = vsel %vm1514, %v1505, %v1513
    %vm1516 = vcmp.eq.f32.partialorder %v1505, 0.0
    %v1517 = vand.u32 %v1505, 2147483648
    %v1518 = vsel %vm1516, %v1517, %v1515
    %v1519 = vrsqrt.pop %v1506
    %v1520 = vmul.f32 %v1519, %v1506
    %v1521 = vmul.f32 %v1520, %v1519
    %v1522 = vmul.f32 0.5, %v1521
    %v1523 = vsub.f32 1.5, %v1522
    %v1524 = vmul.f32 %v1519, %v1523
    %v1525 = vmul.f32 %v1506, %v1524
    %vm1526 = vcmp.eq.f32.partialorder %v1506, inf
    %v1527 = vsel %vm1526, %v1506, %v1525
    %vm1528 = vcmp.eq.f32.partialorder %v1506, 0.0
    %v1529 = vand.u32 %v1506, 2147483648
    %v1530 = vsel %vm1528, %v1529, %v1527
    %v1531 = vadd.f32 %v1518, 1e-06
    %v1532 = vadd.f32 %v1530, 1e-06
    %v1533 = vrsqrt.pop %v1531
    %v1534 = vmul.f32 %v1533, %v1531
    %v1535 = vmul.f32 %v1534, %v1533
    %v1536 = vmul.f32 0.5, %v1535
    %v1537 = vsub.f32 1.5, %v1536
    %v1538 = vmul.f32 %v1533, %v1537
    %vm1539 = vweird.f32 %v1531
    %vm1540 = vweird.f32 %v1533
    %vm1541 = vmor %vm1539, %vm1540
    %v1542 = vsel %vm1541, %v1533, %v1538
    %v1543 = vrsqrt.pop %v1532
    %v1544 = vmul.f32 %v1543, %v1532
    %v1545 = vmul.f32 %v1544, %v1543
    %v1546 = vmul.f32 0.5, %v1545
    %v1547 = vsub.f32 1.5, %v1546
    %v1548 = vmul.f32 %v1543, %v1547
    %vm1549 = vweird.f32 %v1532
    %vm1550 = vweird.f32 %v1543
    %vm1551 = vmor %vm1549, %vm1550
    %v1552 = vsel %vm1551, %v1543, %v1548
    %v1553 = vmul.f32 %v1495, %v1542
    %v1554 = vmul.f32 %v1496, %v1552
    %v1555 = vperm.slane %v858, 6
    %v1556 = vmul.f32 %v1555, %v1553
    %v1557 = vmul.f32 %v1555, %v1554
    %v1558 = vperm.slane %v858, 7
    %v1559 = vadd.f32 %v1556, %v1558
    %v1560 = vadd.f32 %v1557, %v1558
    %1561 = vst.msk [vmem:[#allocation2] sm:$0xff] %vm120, %v1559
    %1562 = vst.msk [vmem:[#allocation2 + $0x8] sm:$0xff] %vm120, %v1560
    // Predicated region
    $region38: #{encoder_forward.1} parent=1 // pred_check
      _
    $region39: #{encoder_forward.1} parent=1 // pred_check_branch
      %1564 = sbr.rel (0) target = $region41
    $region40: #{encoder_forward.1} parent=1 // pred_region
      %1566 = vsyncadd [#allocation3], 0
      %s1567 = sshll.u32 [#allocation2], 4
      %s1568 = int_to_ptr.vmem [resolvable:$true] %s1567
      %s1569 = sshll.u32 %s9, 4
      %s1570 = int_to_ptr.hbm [resolvable:$true] %s1569
      %1575 = dma.vmem_to_hbm [thread:$0]  %s1568, 256, %s1570, [#allocation3], 128, 128, 8
    $region41: #{encoder_forward.1} parent=1 // pred_fallthru
      _
    // Predicated region
    $region42: #{encoder_forward.1} parent=1 // pred_check
      _
    $region43: #{encoder_forward.1} parent=1 // pred_check_branch
      %1577 = sbr.rel (0) target = $region45
    $region44: #{encoder_forward.1} parent=1 // pred_region
      %1579 = dma.done [#allocation3], 256
    $region45: #{encoder_forward.1} parent=1 // pred_fallthru
      _
    %1580 = vsyncpa [#allocation3], 1

</llo_original>
